<compile_context>
chip_gen: v5e
topology: v5e:2x2
jax: 0.10.0
libtpu: 0.0.40
codegen_flags: <defaults>
</compile_context>

<pallas_src>
import jax
import jax.numpy as jnp
from jax.experimental import pallas as pl
from jax.experimental.pallas import tpu as pltpu

IN_DIM = 1536
HID_DIM = 512
OUT_DIM = 1


def mlp_kernel(x_ref, w1_ref, b1_ref, w2_ref, b2_ref, o_ref):
    # fc: (tm, 1536) @ (1536, 512) on the MXU. x arrives at its native dtype
    # and is cast to bf16 here (VPU, hidden under the matmul); accumulate f32.
    x_bf = x_ref[...].astype(jnp.bfloat16)
    h = jnp.dot(x_bf, w1_ref[...], preferred_element_type=jnp.float32)
    h = jnp.maximum(h + b1_ref[...], 0.0)                  # bias + ReLU (VPU)
    # out: K=512, N=1 -> VPU broadcast-multiply + XLU lane reduction instead
    # of an N=1 MXU matmul. w2_ref is the (1, 512) transposed weight row.
    y = jnp.sum(h * w2_ref[...], axis=-1, keepdims=True)   # (tm, 1)
    # Lane-dense store: transpose to (1, tm) so the output block is a full
    # row (unmasked vst) instead of a 1-lane-wide masked column.
    o_ref[...] = (jnp.transpose(y) + b2_ref[...]).astype(o_ref.dtype)


def net_forward(x, w1, b1, w2, b2, *, tm=512):
    """y = relu(x @ w1 + b1) @ w2 + b2, with w1: (1536,512), w2: (512,1)."""
    B = x.shape[0]

    # Only the bandwidth-dominant W1 is pre-cast (1.5 MiB, read once per call
    # and kept VMEM-resident across grid steps); x streams at native dtype.
    w1_bf = w1.astype(jnp.bfloat16)
    w2_row = w2.reshape(1, HID_DIM).astype(jnp.float32)    # (1, 512) VPU path
    b1_row = b1.reshape(1, HID_DIM).astype(jnp.float32)
    b2_row = b2.reshape(1, OUT_DIM).astype(jnp.float32)

    # Batch tile: single tile for small B (splitting would just duplicate the
    # W1 stream), tm=512 otherwise (>=2 tiles -> both v7x TCs get work).
    if B <= tm:
        tm = B if B < 8 else ((B + 7) // 8) * 8
    n_tiles = pl.cdiv(B, tm)

    out = pl.pallas_call(
        mlp_kernel,
        out_shape=jax.ShapeDtypeStruct((n_tiles, tm), jnp.float32),
        grid=(n_tiles,),
        in_specs=[
            pl.BlockSpec((tm, IN_DIM), lambda i: (i, 0)),          # x tile (ragged tail OK)
            pl.BlockSpec((IN_DIM, HID_DIM), lambda i: (0, 0)),     # W1 (resident)
            pl.BlockSpec((1, HID_DIM), lambda i: (0, 0)),          # b1 (resident)
            pl.BlockSpec((1, HID_DIM), lambda i: (0, 0)),          # w2 row (resident)
            pl.BlockSpec((1, OUT_DIM), lambda i: (0, 0)),          # b2 (resident)
        ],
        out_specs=pl.BlockSpec((1, tm), lambda i: (i, 0)),         # lane-dense row
        compiler_params=pltpu.CompilerParams(
            dimension_semantics=("parallel",),
        ),
    )(x, w1_bf, b1_row, w2_row, b2_row)

    # (n_tiles, tm) lane-dense slab -> (B, 1); ragged-tail rows are dropped.
    return out.reshape(-1)[:B].reshape(B, OUT_DIM)


def init_params(key):
    # Mimic torch.nn.Linear default init: U(-1/sqrt(fan_in), 1/sqrt(fan_in)).
    k1, k2, k3, k4 = jax.random.split(key, 4)
    bound1 = 1.0 / jnp.sqrt(jnp.float32(IN_DIM))
    bound2 = 1.0 / jnp.sqrt(jnp.float32(HID_DIM))
    w1 = jax.random.uniform(k1, (IN_DIM, HID_DIM), jnp.float32, -bound1, bound1)
    b1 = jax.random.uniform(k2, (1, HID_DIM), jnp.float32, -bound1, bound1)
    w2 = jax.random.uniform(k3, (HID_DIM, OUT_DIM), jnp.float32, -bound2, bound2)
    b2 = jax.random.uniform(k4, (1, OUT_DIM), jnp.float32, -bound2, bound2)
    return w1, b1, w2, b2


if __name__ == "__main__":
    key = jax.random.PRNGKey(0)
    kx, kp = jax.random.split(key)

    B = 8  # small batch, consistent with the (B, 1536) input the module expects
    x = jax.random.normal(kx, (B, IN_DIM), jnp.float32)
    w1, b1, w2, b2 = init_params(kp)

    out = jax.block_until_ready(net_forward(x, w1, b1, w2, b2))
    assert out.shape == (B, OUT_DIM)

    # Reference matching the kernel's bf16-input / f32-accumulate first layer.
    ref_h = jnp.maximum(
        jnp.dot(x.astype(jnp.bfloat16), w1.astype(jnp.bfloat16),
                preferred_element_type=jnp.float32) + b1, 0.0)
    ref_bf16 = ref_h @ w2 + b2
    assert jnp.allclose(out, ref_bf16, atol=2e-3, rtol=2e-3)

    # Sanity check against the full-f32 reference (loose tol for bf16 matmul).
    ref_f32 = jnp.maximum(x @ w1 + b1, 0.0) @ w2 + b2
    assert jnp.allclose(out, ref_f32, atol=5e-2, rtol=5e-2)

    print("KERNEL_OK")
</pallas_src>

<mosaic_0001>
module attributes {stable_mosaic.version = 11 : i64} {
  func.func @mlp_kernel(%arg0: i32, %arg1: memref<8x1536xf32, #tpu.memory_space<vmem>>, %arg2: memref<1536x512xbf16, #tpu.memory_space<vmem>>, %arg3: memref<1x512xf32, #tpu.memory_space<vmem>>, %arg4: memref<1x512xf32, #tpu.memory_space<vmem>>, %arg5: memref<1x1xf32, #tpu.memory_space<vmem>>, %arg6: memref<1x8xf32, #tpu.memory_space<vmem>>) attributes {dimension_semantics = [#tpu.dimension_semantics<parallel>], iteration_bounds = array<i64: 1>, scalar_prefetch = 0 : i64, scratch_operands = 0 : i64, tpu.core_type = #tpu.core_type<tc>, window_params = [{transform_indices = @transform_0, window_bounds = array<i64: 8, 1536>}, {pipeline_mode = #tpu.pipeline_mode<synchronous>, transform_indices = @transform_1, window_bounds = array<i64: 1536, 512>}, {pipeline_mode = #tpu.pipeline_mode<synchronous>, transform_indices = @transform_2, window_bounds = array<i64: 1, 512>}, {pipeline_mode = #tpu.pipeline_mode<synchronous>, transform_indices = @transform_3, window_bounds = array<i64: 1, 512>}, {pipeline_mode = #tpu.pipeline_mode<synchronous>, transform_indices = @transform_4, window_bounds = array<i64: 1, 1>}, {transform_indices = @transform_5, window_bounds = array<i64: 1, 8>}]} {
    %c0 = arith.constant 0 : index
    %c0_0 = arith.constant 0 : index
    %0 = vector.load %arg1[%c0, %c0_0] : memref<8x1536xf32, #tpu.memory_space<vmem>>, vector<8x1536xf32>
    %1 = arith.truncf %0 : vector<8x1536xf32> to vector<8x1536xbf16>
    %c0_1 = arith.constant 0 : index
    %c0_2 = arith.constant 0 : index
    %2 = vector.load %arg2[%c0_1, %c0_2] : memref<1536x512xbf16, #tpu.memory_space<vmem>>, vector<1536x512xbf16>
    %cst = arith.constant dense<0.000000e+00> : vector<8x512xf32>
    %3 = tpu.matmul %1, %2, %cst {dimension_numbers = #tpu.dot_dimension_numbers<[1], [0], [0], [1], [0, 0, 1, 1], [], []>} : vector<8x1536xbf16>, vector<1536x512xbf16>, vector<8x512xf32> -> vector<8x512xf32>
    %c0_3 = arith.constant 0 : index
    %c0_4 = arith.constant 0 : index
    %4 = vector.load %arg3[%c0_3, %c0_4] : memref<1x512xf32, #tpu.memory_space<vmem>>, vector<1x512xf32>
    %5 = vector.broadcast %4 : vector<1x512xf32> to vector<8x512xf32>
    %6 = arith.addf %3, %5 : vector<8x512xf32>
    %cst_5 = arith.constant 0.000000e+00 : f32
    %7 = vector.broadcast %cst_5 : f32 to vector<8x512xf32>
    %8 = arith.maximumf %6, %7 : vector<8x512xf32>
    %c0_6 = arith.constant 0 : index
    %c0_7 = arith.constant 0 : index
    %9 = vector.load %arg4[%c0_6, %c0_7] : memref<1x512xf32, #tpu.memory_space<vmem>>, vector<1x512xf32>
    %10 = vector.broadcast %9 : vector<1x512xf32> to vector<8x512xf32>
    %11 = arith.mulf %8, %10 : vector<8x512xf32>
    %cst_8 = arith.constant dense<0.000000e+00> : vector<8xf32>
    %12 = vector.multi_reduction <add>, %11, %cst_8 [1] : vector<8x512xf32> to vector<8xf32>
    %13 = vector.shape_cast %12 : vector<8xf32> to vector<8x1xf32>
    %14 = tpu.transpose %13, [1, 0] : vector<8x1xf32> -> vector<1x8xf32>
    %c0_9 = arith.constant 0 : index
    %c0_10 = arith.constant 0 : index
    %15 = vector.load %arg5[%c0_9, %c0_10] : memref<1x1xf32, #tpu.memory_space<vmem>>, vector<1x1xf32>
    %16 = vector.broadcast %15 : vector<1x1xf32> to vector<1x8xf32>
    %17 = arith.addf %14, %16 : vector<1x8xf32>
    %c0_11 = arith.constant 0 : index
    %c0_12 = arith.constant 0 : index
    %18 = vector.load %arg6[%c0_11, %c0_12] : memref<1x8xf32, #tpu.memory_space<vmem>>, vector<1x8xf32>
    tpu.vector_store %arg6[%c0_11, %c0_12], %17 {strides = array<i32>} : memref<1x8xf32, #tpu.memory_space<vmem>>, vector<1x8xf32>,
    return
  }
  func.func @transform_0(%arg0: i32) -> (i32, i32) {
    %c0_i32 = arith.constant 0 : i32
    %c0_i32_0 = arith.constant 0 : i32
    return %arg0, %c0_i32 : i32, i32
  }
  func.func @transform_1(%arg0: i32) -> (i32, i32) {
    %c0_i32 = arith.constant 0 : i32
    %c0_i32_0 = arith.constant 0 : i32
    %c0_i32_1 = arith.constant 0 : i32
    return %c0_i32, %c0_i32_0 : i32, i32
  }
  func.func @transform_2(%arg0: i32) -> (i32, i32) {
    %c0_i32 = arith.constant 0 : i32
    %c0_i32_0 = arith.constant 0 : i32
    %c0_i32_1 = arith.constant 0 : i32
    return %c0_i32, %c0_i32_0 : i32, i32
  }
  func.func @transform_3(%arg0: i32) -> (i32, i32) {
    %c0_i32 = arith.constant 0 : i32
    %c0_i32_0 = arith.constant 0 : i32
    %c0_i32_1 = arith.constant 0 : i32
    return %c0_i32, %c0_i32_0 : i32, i32
  }
  func.func @transform_4(%arg0: i32) -> (i32, i32) {
    %c0_i32 = arith.constant 0 : i32
    %c0_i32_0 = arith.constant 0 : i32
    %c0_i32_1 = arith.constant 0 : i32
    return %c0_i32, %c0_i32_0 : i32, i32
  }
  func.func @transform_5(%arg0: i32) -> (i32, i32) {
    %c0_i32 = arith.constant 0 : i32
    %c0_i32_0 = arith.constant 0 : i32
    return %arg0, %c0_i32 : i32, i32
  }
}

</mosaic_0001>

<llo_original>
// kernel: tpu_custom_call.1
$region0: #{tpu_custom_call.1}
  #allocation0 [shape = 'u32[]', space=smem, size = 0x4, offset = 0x4, fixed_abs, tag = 'smem constant byte address 0x4 - core index']
  #allocation1 [shape = 'u32[72,128]{1,0:T(1,128)}', space=vmem, size = 0x9000, scoped, tag = 'internal scratch']
  #allocation2 [shape = 'f32[1,1]{1,0:T(1,128)S(1)}', space=vmem, size = 0x200, scoped, tag = 'scoped memory for tpu_custom_call.1']
  %s0 = inlined_call_operand.hbm [shape: f32[8,1536], index: 0, kind: input, shape index: {}]
  %s1 = inlined_call_operand.hbm [shape: bf16[1536,512], index: 1, kind: input, shape index: {}]
  %s2 = inlined_call_operand.hbm [shape: f32[1,512], index: 2, kind: input, shape index: {}]
  %s3 = inlined_call_operand.hbm [shape: f32[1,512], index: 3, kind: input, shape index: {}]
  %s4 = inlined_call_operand.<no memory space> [shape: f32[1,1], index: 4, kind: input, shape index: {}]
  %s5 = inlined_call_operand.hbm [shape: f32[1,8], index: 5, kind: output, shape index: {}]
  %s6 = sld [smem:[#allocation0]]
  $region46: #{tpu_custom_call.1} parent=0
    _
  %s8 = ssub.s32 1, %s6
  %s9 = scalar_select 0, %s8, %s6
  %v10 = vstv %s4
  %11 = vst [vmem:[#allocation2] sm:$0x1] %v10
  $region1: #{tpu_custom_call.1} parent=0
    #allocation3 [shape = 'u8[49152]{0}', space=vmem, size = 0xc000, scoped, tag = 'input window, operand 0, single buffered']
    #allocation4 [shape = 's32[1]{0}', space=sflag, size = 0x4, scoped, tag = 'scoped memory for tpu_custom_call.1']
    #allocation5 [shape = 's32[1]{0}', space=sflag, size = 0x4, scoped, tag = 'scoped memory for tpu_custom_call.1']
    #allocation6 [shape = 'u8[1572864]{0}', space=vmem, size = 0x180000, scoped, tag = 'input window, operand 1, single buffered']
    #allocation7 [shape = 's32[1]{0}', space=sflag, size = 0x4, scoped, tag = 'scoped memory for tpu_custom_call.1']
    #allocation8 [shape = 'u8[2048]{0}', space=vmem, size = 0x800, scoped, tag = 'input window, operand 2, single buffered']
    #allocation9 [shape = 'u8[2048]{0}', space=vmem, size = 0x800, scoped, tag = 'input window, operand 3, single buffered']
    #allocation10 [shape = 's32[1]{0}', space=sflag, size = 0x4, scoped, tag = 'scoped memory for tpu_custom_call.1']
    #allocation11 [shape = 'u8[512]{0}', space=vmem, size = 0x400, scoped, tag = 'output window, operand 0, single buffered']
    %12 = vsyncpa [#allocation4], 0
    %13 = vsyncpa [#allocation7], 0
    %14 = vsyncpa [#allocation10], 0
    %15 = vsyncpa [#allocation5], 0
    // Predicated region
    $region2: #{tpu_custom_call.1} parent=1 // pred_check
      _
    $region3: #{tpu_custom_call.1} parent=1 // pred_check_branch
      %17 = sbr.rel (0) target = $region5
    $region4: #{tpu_custom_call.1} parent=1 // pred_region
      %19 = vsyncadd [#allocation4], 0
      %s21 = sshll.u32 %s0, 4
      %s22 = int_to_ptr.hbm [resolvable:$true] %s21
      %s23 = sshll.u32 [#allocation3], 4
      %s24 = int_to_ptr.vmem [resolvable:$true] %s23
      %26 = dma.hbm_to_vmem [thread:$0]  %s22, 1536, %s24, [#allocation4]
    $region5: #{tpu_custom_call.1} parent=1 // pred_fallthru
      _
    // Predicated region
    $region6: #{tpu_custom_call.1} parent=1 // pred_check
      _
    $region7: #{tpu_custom_call.1} parent=1 // pred_check_branch
      %28 = sbr.rel (0) target = $region9
    $region8: #{tpu_custom_call.1} parent=1 // pred_region
      %30 = vsyncadd [#allocation7], 0
      %s31 = sshll.u32 %s1, 4
      %s32 = int_to_ptr.hbm [resolvable:$true] %s31
      %s33 = sshll.u32 [#allocation6], 4
      %s34 = int_to_ptr.vmem [resolvable:$true] %s33
      %39 = dma.hbm_to_vmem [thread:$0]  %s32, 49152, %s34, [#allocation7], 256, 256, 16
    $region9: #{tpu_custom_call.1} parent=1 // pred_fallthru
      _
    // Predicated region
    $region10: #{tpu_custom_call.1} parent=1 // pred_check
      _
    $region11: #{tpu_custom_call.1} parent=1 // pred_check_branch
      %41 = sbr.rel (0) target = $region13
    $region12: #{tpu_custom_call.1} parent=1 // pred_region
      %43 = vsyncadd [#allocation7], 0
      %s45 = sshll.u32 %s2, 4
      %s46 = int_to_ptr.hbm [resolvable:$true] %s45
      %s47 = sshll.u32 [#allocation8], 4
      %s48 = int_to_ptr.vmem [resolvable:$true] %s47
      %50 = dma.hbm_to_vmem [thread:$0]  %s46, 64, %s48, [#allocation7]
    $region13: #{tpu_custom_call.1} parent=1 // pred_fallthru
      _
    // Predicated region
    $region14: #{tpu_custom_call.1} parent=1 // pred_check
      _
    $region15: #{tpu_custom_call.1} parent=1 // pred_check_branch
      %52 = sbr.rel (0) target = $region17
    $region16: #{tpu_custom_call.1} parent=1 // pred_region
      %54 = vsyncadd [#allocation10], 0
      %s56 = sshll.u32 %s3, 4
      %s57 = int_to_ptr.hbm [resolvable:$true] %s56
      %s58 = sshll.u32 [#allocation9], 4
      %s59 = int_to_ptr.vmem [resolvable:$true] %s58
      %61 = dma.hbm_to_vmem [thread:$0]  %s57, 64, %s59, [#allocation10]
    $region17: #{tpu_custom_call.1} parent=1 // pred_fallthru
      _
    // Predicated region
    $region18: #{tpu_custom_call.1} parent=1 // pred_check
      _
    $region19: #{tpu_custom_call.1} parent=1 // pred_check_branch
      %63 = sbr.rel (0) target = $region21
    $region20: #{tpu_custom_call.1} parent=1 // pred_region
      _
    $region21: #{tpu_custom_call.1} parent=1 // pred_fallthru
      _
    // Predicated region
    $region22: #{tpu_custom_call.1} parent=1 // pred_check
      _
    $region23: #{tpu_custom_call.1} parent=1 // pred_check_branch
      %65 = sbr.rel (0) target = $region25
    $region24: #{tpu_custom_call.1} parent=1 // pred_region
      %67 = dma.done [#allocation4], 1536
    $region25: #{tpu_custom_call.1} parent=1 // pred_fallthru
      _
    // Predicated region
    $region26: #{tpu_custom_call.1} parent=1 // pred_check
      _
    $region27: #{tpu_custom_call.1} parent=1 // pred_check_branch
      %69 = sbr.rel (0) target = $region29
    $region28: #{tpu_custom_call.1} parent=1 // pred_region
      %71 = dma.done [#allocation7], 49152
    $region29: #{tpu_custom_call.1} parent=1 // pred_fallthru
      _
    // Predicated region
    $region30: #{tpu_custom_call.1} parent=1 // pred_check
      _
    $region31: #{tpu_custom_call.1} parent=1 // pred_check_branch
      %73 = sbr.rel (0) target = $region33
    $region32: #{tpu_custom_call.1} parent=1 // pred_region
      %75 = dma.done [#allocation7], 64
    $region33: #{tpu_custom_call.1} parent=1 // pred_fallthru
      _
    // Predicated region
    $region34: #{tpu_custom_call.1} parent=1 // pred_check
      _
    $region35: #{tpu_custom_call.1} parent=1 // pred_check_branch
      %77 = sbr.rel (0) target = $region37
    $region36: #{tpu_custom_call.1} parent=1 // pred_region
      %79 = dma.done [#allocation10], 64
    $region37: #{tpu_custom_call.1} parent=1 // pred_fallthru
      _
    %v80 = vld [vmem:[#allocation3] sm:$0xff]
    %v81 = vld [vmem:[#allocation3 + $0x8] sm:$0xff]
    %v82 = vld [vmem:[#allocation3 + $0x10] sm:$0xff]
    %v83 = vld [vmem:[#allocation3 + $0x18] sm:$0xff]
    %v84 = vld [vmem:[#allocation3 + $0x20] sm:$0xff]
    %v85 = vld [vmem:[#allocation3 + $0x28] sm:$0xff]
    %v86 = vld [vmem:[#allocation3 + $0x30] sm:$0xff]
    %v87 = vld [vmem:[#allocation3 + $0x38] sm:$0xff]
    %v88 = vld [vmem:[#allocation3 + $0x40] sm:$0xff]
    %v89 = vld [vmem:[#allocation3 + $0x48] sm:$0xff]
    %v90 = vld [vmem:[#allocation3 + $0x50] sm:$0xff]
    %v91 = vld [vmem:[#allocation3 + $0x58] sm:$0xff]
    %v92 = vpack.c.bf16 %v80, %v80
    %v93 = vpack.c.bf16 %v81, %v81
    %v94 = vpack.c.bf16 %v82, %v82
    %v95 = vpack.c.bf16 %v83, %v83
    %v96 = vpack.c.bf16 %v84, %v84
    %v97 = vpack.c.bf16 %v85, %v85
    %v98 = vpack.c.bf16 %v86, %v86
    %v99 = vpack.c.bf16 %v87, %v87
    %v100 = vpack.c.bf16 %v88, %v88
    %v101 = vpack.c.bf16 %v89, %v89
    %v102 = vpack.c.bf16 %v90, %v90
    %v103 = vpack.c.bf16 %v91, %v91
    %v104 = vld [vmem:[#allocation6] sm:$0xff]
    %v105 = vld [vmem:[#allocation6 + $0x8] sm:$0xff]
    %v106 = vld [vmem:[#allocation6 + $0x10] sm:$0xff]
    %v107 = vld [vmem:[#allocation6 + $0x18] sm:$0xff]
    %v108 = vld [vmem:[#allocation6 + $0x20] sm:$0xff]
    %v109 = vld [vmem:[#allocation6 + $0x28] sm:$0xff]
    %v110 = vld [vmem:[#allocation6 + $0x30] sm:$0xff]
    %v111 = vld [vmem:[#allocation6 + $0x38] sm:$0xff]
    %v112 = vld [vmem:[#allocation6 + $0x40] sm:$0xff]
    %v113 = vld [vmem:[#allocation6 + $0x48] sm:$0xff]
    %v114 = vld [vmem:[#allocation6 + $0x50] sm:$0xff]
    %v115 = vld [vmem:[#allocation6 + $0x58] sm:$0xff]
    %v116 = vld [vmem:[#allocation6 + $0x60] sm:$0xff]
    %v117 = vld [vmem:[#allocation6 + $0x68] sm:$0xff]
    %v118 = vld [vmem:[#allocation6 + $0x70] sm:$0xff]
    %v119 = vld [vmem:[#allocation6 + $0x78] sm:$0xff]
    %v120 = vld [vmem:[#allocation6 + $0x80] sm:$0xff]
    %v121 = vld [vmem:[#allocation6 + $0x88] sm:$0xff]
    %v122 = vld [vmem:[#allocation6 + $0x90] sm:$0xff]
    %v123 = vld [vmem:[#allocation6 + $0x98] sm:$0xff]
    %v124 = vld [vmem:[#allocation6 + $0xa0] sm:$0xff]
    %v125 = vld [vmem:[#allocation6 + $0xa8] sm:$0xff]
    %v126 = vld [vmem:[#allocation6 + $0xb0] sm:$0xff]
    %v127 = vld [vmem:[#allocation6 + $0xb8] sm:$0xff]
    %v128 = vld [vmem:[#allocation6 + $0xc0] sm:$0xff]
    %v129 = vld [vmem:[#allocation6 + $0xc8] sm:$0xff]
    %v130 = vld [vmem:[#allocation6 + $0xd0] sm:$0xff]
    %v131 = vld [vmem:[#allocation6 + $0xd8] sm:$0xff]
    %v132 = vld [vmem:[#allocation6 + $0xe0] sm:$0xff]
    %v133 = vld [vmem:[#allocation6 + $0xe8] sm:$0xff]
    %v134 = vld [vmem:[#allocation6 + $0xf0] sm:$0xff]
    %v135 = vld [vmem:[#allocation6 + $0xf8] sm:$0xff]
    %v136 = vld [vmem:[#allocation6 + $0x100] sm:$0xff]
    %v137 = vld [vmem:[#allocation6 + $0x108] sm:$0xff]
    %v138 = vld [vmem:[#allocation6 + $0x110] sm:$0xff]
    %v139 = vld [vmem:[#allocation6 + $0x118] sm:$0xff]
    %v140 = vld [vmem:[#allocation6 + $0x120] sm:$0xff]
    %v141 = vld [vmem:[#allocation6 + $0x128] sm:$0xff]
    %v142 = vld [vmem:[#allocation6 + $0x130] sm:$0xff]
    %v143 = vld [vmem:[#allocation6 + $0x138] sm:$0xff]
    %v144 = vld [vmem:[#allocation6 + $0x140] sm:$0xff]
    %v145 = vld [vmem:[#allocation6 + $0x148] sm:$0xff]
    %v146 = vld [vmem:[#allocation6 + $0x150] sm:$0xff]
    %v147 = vld [vmem:[#allocation6 + $0x158] sm:$0xff]
    %v148 = vld [vmem:[#allocation6 + $0x160] sm:$0xff]
    %v149 = vld [vmem:[#allocation6 + $0x168] sm:$0xff]
    %v150 = vld [vmem:[#allocation6 + $0x170] sm:$0xff]
    %v151 = vld [vmem:[#allocation6 + $0x178] sm:$0xff]
    %v152 = vld [vmem:[#allocation6 + $0x180] sm:$0xff]
    %v153 = vld [vmem:[#allocation6 + $0x188] sm:$0xff]
    %v154 = vld [vmem:[#allocation6 + $0x190] sm:$0xff]
    %v155 = vld [vmem:[#allocation6 + $0x198] sm:$0xff]
    %v156 = vld [vmem:[#allocation6 + $0x1a0] sm:$0xff]
    %v157 = vld [vmem:[#allocation6 + $0x1a8] sm:$0xff]
    %v158 = vld [vmem:[#allocation6 + $0x1b0] sm:$0xff]
    %v159 = vld [vmem:[#allocation6 + $0x1b8] sm:$0xff]
    %v160 = vld [vmem:[#allocation6 + $0x1c0] sm:$0xff]
    %v161 = vld [vmem:[#allocation6 + $0x1c8] sm:$0xff]
    %v162 = vld [vmem:[#allocation6 + $0x1d0] sm:$0xff]
    %v163 = vld [vmem:[#allocation6 + $0x1d8] sm:$0xff]
    %v164 = vld [vmem:[#allocation6 + $0x1e0] sm:$0xff]
    %v165 = vld [vmem:[#allocation6 + $0x1e8] sm:$0xff]
    %v166 = vld [vmem:[#allocation6 + $0x1f0] sm:$0xff]
    %v167 = vld [vmem:[#allocation6 + $0x1f8] sm:$0xff]
    %v168 = vld [vmem:[#allocation6 + $0x200] sm:$0xff]
    %v169 = vld [vmem:[#allocation6 + $0x208] sm:$0xff]
    %v170 = vld [vmem:[#allocation6 + $0x210] sm:$0xff]
    %v171 = vld [vmem:[#allocation6 + $0x218] sm:$0xff]
    %v172 = vld [vmem:[#allocation6 + $0x220] sm:$0xff]
    %v173 = vld [vmem:[#allocation6 + $0x228] sm:$0xff]
    %v174 = vld [vmem:[#allocation6 + $0x230] sm:$0xff]
    %v175 = vld [vmem:[#allocation6 + $0x238] sm:$0xff]
    %v176 = vld [vmem:[#allocation6 + $0x240] sm:$0xff]
    %v177 = vld [vmem:[#allocation6 + $0x248] sm:$0xff]
    %v178 = vld [vmem:[#allocation6 + $0x250] sm:$0xff]
    %v179 = vld [vmem:[#allocation6 + $0x258] sm:$0xff]
    %v180 = vld [vmem:[#allocation6 + $0x260] sm:$0xff]
    %v181 = vld [vmem:[#allocation6 + $0x268] sm:$0xff]
    %v182 = vld [vmem:[#allocation6 + $0x270] sm:$0xff]
    %v183 = vld [vmem:[#allocation6 + $0x278] sm:$0xff]
    %v184 = vld [vmem:[#allocation6 + $0x280] sm:$0xff]
    %v185 = vld [vmem:[#allocation6 + $0x288] sm:$0xff]
    %v186 = vld [vmem:[#allocation6 + $0x290] sm:$0xff]
    %v187 = vld [vmem:[#allocation6 + $0x298] sm:$0xff]
    %v188 = vld [vmem:[#allocation6 + $0x2a0] sm:$0xff]
    %v189 = vld [vmem:[#allocation6 + $0x2a8] sm:$0xff]
    %v190 = vld [vmem:[#allocation6 + $0x2b0] sm:$0xff]
    %v191 = vld [vmem:[#allocation6 + $0x2b8] sm:$0xff]
    %v192 = vld [vmem:[#allocation6 + $0x2c0] sm:$0xff]
    %v193 = vld [vmem:[#allocation6 + $0x2c8] sm:$0xff]
    %v194 = vld [vmem:[#allocation6 + $0x2d0] sm:$0xff]
    %v195 = vld [vmem:[#allocation6 + $0x2d8] sm:$0xff]
    %v196 = vld [vmem:[#allocation6 + $0x2e0] sm:$0xff]
    %v197 = vld [vmem:[#allocation6 + $0x2e8] sm:$0xff]
    %v198 = vld [vmem:[#allocation6 + $0x2f0] sm:$0xff]
    %v199 = vld [vmem:[#allocation6 + $0x2f8] sm:$0xff]
    %v200 = vld [vmem:[#allocation6 + $0x300] sm:$0xff]
    %v201 = vld [vmem:[#allocation6 + $0x308] sm:$0xff]
    %v202 = vld [vmem:[#allocation6 + $0x310] sm:$0xff]
    %v203 = vld [vmem:[#allocation6 + $0x318] sm:$0xff]
    %v204 = vld [vmem:[#allocation6 + $0x320] sm:$0xff]
    %v205 = vld [vmem:[#allocation6 + $0x328] sm:$0xff]
    %v206 = vld [vmem:[#allocation6 + $0x330] sm:$0xff]
    %v207 = vld [vmem:[#allocation6 + $0x338] sm:$0xff]
    %v208 = vld [vmem:[#allocation6 + $0x340] sm:$0xff]
    %v209 = vld [vmem:[#allocation6 + $0x348] sm:$0xff]
    %v210 = vld [vmem:[#allocation6 + $0x350] sm:$0xff]
    %v211 = vld [vmem:[#allocation6 + $0x358] sm:$0xff]
    %v212 = vld [vmem:[#allocation6 + $0x360] sm:$0xff]
    %v213 = vld [vmem:[#allocation6 + $0x368] sm:$0xff]
    %v214 = vld [vmem:[#allocation6 + $0x370] sm:$0xff]
    %v215 = vld [vmem:[#allocation6 + $0x378] sm:$0xff]
    %v216 = vld [vmem:[#allocation6 + $0x380] sm:$0xff]
    %v217 = vld [vmem:[#allocation6 + $0x388] sm:$0xff]
    %v218 = vld [vmem:[#allocation6 + $0x390] sm:$0xff]
    %v219 = vld [vmem:[#allocation6 + $0x398] sm:$0xff]
    %v220 = vld [vmem:[#allocation6 + $0x3a0] sm:$0xff]
    %v221 = vld [vmem:[#allocation6 + $0x3a8] sm:$0xff]
    %v222 = vld [vmem:[#allocation6 + $0x3b0] sm:$0xff]
    %v223 = vld [vmem:[#allocation6 + $0x3b8] sm:$0xff]
    %v224 = vld [vmem:[#allocation6 + $0x3c0] sm:$0xff]
    %v225 = vld [vmem:[#allocation6 + $0x3c8] sm:$0xff]
    %v226 = vld [vmem:[#allocation6 + $0x3d0] sm:$0xff]
    %v227 = vld [vmem:[#allocation6 + $0x3d8] sm:$0xff]
    %v228 = vld [vmem:[#allocation6 + $0x3e0] sm:$0xff]
    %v229 = vld [vmem:[#allocation6 + $0x3e8] sm:$0xff]
    %v230 = vld [vmem:[#allocation6 + $0x3f0] sm:$0xff]
    %v231 = vld [vmem:[#allocation6 + $0x3f8] sm:$0xff]
    %v232 = vld [vmem:[#allocation6 + $0x400] sm:$0xff]
    %v233 = vld [vmem:[#allocation6 + $0x408] sm:$0xff]
    %v234 = vld [vmem:[#allocation6 + $0x410] sm:$0xff]
    %v235 = vld [vmem:[#allocation6 + $0x418] sm:$0xff]
    %v236 = vld [vmem:[#allocation6 + $0x420] sm:$0xff]
    %v237 = vld [vmem:[#allocation6 + $0x428] sm:$0xff]
    %v238 = vld [vmem:[#allocation6 + $0x430] sm:$0xff]
    %v239 = vld [vmem:[#allocation6 + $0x438] sm:$0xff]
    %v240 = vld [vmem:[#allocation6 + $0x440] sm:$0xff]
    %v241 = vld [vmem:[#allocation6 + $0x448] sm:$0xff]
    %v242 = vld [vmem:[#allocation6 + $0x450] sm:$0xff]
    %v243 = vld [vmem:[#allocation6 + $0x458] sm:$0xff]
    %v244 = vld [vmem:[#allocation6 + $0x460] sm:$0xff]
    %v245 = vld [vmem:[#allocation6 + $0x468] sm:$0xff]
    %v246 = vld [vmem:[#allocation6 + $0x470] sm:$0xff]
    %v247 = vld [vmem:[#allocation6 + $0x478] sm:$0xff]
    %v248 = vld [vmem:[#allocation6 + $0x480] sm:$0xff]
    %v249 = vld [vmem:[#allocation6 + $0x488] sm:$0xff]
    %v250 = vld [vmem:[#allocation6 + $0x490] sm:$0xff]
    %v251 = vld [vmem:[#allocation6 + $0x498] sm:$0xff]
    %v252 = vld [vmem:[#allocation6 + $0x4a0] sm:$0xff]
    %v253 = vld [vmem:[#allocation6 + $0x4a8] sm:$0xff]
    %v254 = vld [vmem:[#allocation6 + $0x4b0] sm:$0xff]
    %v255 = vld [vmem:[#allocation6 + $0x4b8] sm:$0xff]
    %v256 = vld [vmem:[#allocation6 + $0x4c0] sm:$0xff]
    %v257 = vld [vmem:[#allocation6 + $0x4c8] sm:$0xff]
    %v258 = vld [vmem:[#allocation6 + $0x4d0] sm:$0xff]
    %v259 = vld [vmem:[#allocation6 + $0x4d8] sm:$0xff]
    %v260 = vld [vmem:[#allocation6 + $0x4e0] sm:$0xff]
    %v261 = vld [vmem:[#allocation6 + $0x4e8] sm:$0xff]
    %v262 = vld [vmem:[#allocation6 + $0x4f0] sm:$0xff]
    %v263 = vld [vmem:[#allocation6 + $0x4f8] sm:$0xff]
    %v264 = vld [vmem:[#allocation6 + $0x500] sm:$0xff]
    %v265 = vld [vmem:[#allocation6 + $0x508] sm:$0xff]
    %v266 = vld [vmem:[#allocation6 + $0x510] sm:$0xff]
    %v267 = vld [vmem:[#allocation6 + $0x518] sm:$0xff]
    %v268 = vld [vmem:[#allocation6 + $0x520] sm:$0xff]
    %v269 = vld [vmem:[#allocation6 + $0x528] sm:$0xff]
    %v270 = vld [vmem:[#allocation6 + $0x530] sm:$0xff]
    %v271 = vld [vmem:[#allocation6 + $0x538] sm:$0xff]
    %v272 = vld [vmem:[#allocation6 + $0x540] sm:$0xff]
    %v273 = vld [vmem:[#allocation6 + $0x548] sm:$0xff]
    %v274 = vld [vmem:[#allocation6 + $0x550] sm:$0xff]
    %v275 = vld [vmem:[#allocation6 + $0x558] sm:$0xff]
    %v276 = vld [vmem:[#allocation6 + $0x560] sm:$0xff]
    %v277 = vld [vmem:[#allocation6 + $0x568] sm:$0xff]
    %v278 = vld [vmem:[#allocation6 + $0x570] sm:$0xff]
    %v279 = vld [vmem:[#allocation6 + $0x578] sm:$0xff]
    %v280 = vld [vmem:[#allocation6 + $0x580] sm:$0xff]
    %v281 = vld [vmem:[#allocation6 + $0x588] sm:$0xff]
    %v282 = vld [vmem:[#allocation6 + $0x590] sm:$0xff]
    %v283 = vld [vmem:[#allocation6 + $0x598] sm:$0xff]
    %v284 = vld [vmem:[#allocation6 + $0x5a0] sm:$0xff]
    %v285 = vld [vmem:[#allocation6 + $0x5a8] sm:$0xff]
    %v286 = vld [vmem:[#allocation6 + $0x5b0] sm:$0xff]
    %v287 = vld [vmem:[#allocation6 + $0x5b8] sm:$0xff]
    %v288 = vld [vmem:[#allocation6 + $0x5c0] sm:$0xff]
    %v289 = vld [vmem:[#allocation6 + $0x5c8] sm:$0xff]
    %v290 = vld [vmem:[#allocation6 + $0x5d0] sm:$0xff]
    %v291 = vld [vmem:[#allocation6 + $0x5d8] sm:$0xff]
    %v292 = vld [vmem:[#allocation6 + $0x5e0] sm:$0xff]
    %v293 = vld [vmem:[#allocation6 + $0x5e8] sm:$0xff]
    %v294 = vld [vmem:[#allocation6 + $0x5f0] sm:$0xff]
    %v295 = vld [vmem:[#allocation6 + $0x5f8] sm:$0xff]
    %v296 = vld [vmem:[#allocation6 + $0x600] sm:$0xff]
    %v297 = vld [vmem:[#allocation6 + $0x608] sm:$0xff]
    %v298 = vld [vmem:[#allocation6 + $0x610] sm:$0xff]
    %v299 = vld [vmem:[#allocation6 + $0x618] sm:$0xff]
    %v300 = vld [vmem:[#allocation6 + $0x620] sm:$0xff]
    %v301 = vld [vmem:[#allocation6 + $0x628] sm:$0xff]
    %v302 = vld [vmem:[#allocation6 + $0x630] sm:$0xff]
    %v303 = vld [vmem:[#allocation6 + $0x638] sm:$0xff]
    %v304 = vld [vmem:[#allocation6 + $0x640] sm:$0xff]
    %v305 = vld [vmem:[#allocation6 + $0x648] sm:$0xff]
    %v306 = vld [vmem:[#allocation6 + $0x650] sm:$0xff]
    %v307 = vld [vmem:[#allocation6 + $0x658] sm:$0xff]
    %v308 = vld [vmem:[#allocation6 + $0x660] sm:$0xff]
    %v309 = vld [vmem:[#allocation6 + $0x668] sm:$0xff]
    %v310 = vld [vmem:[#allocation6 + $0x670] sm:$0xff]
    %v311 = vld [vmem:[#allocation6 + $0x678] sm:$0xff]
    %v312 = vld [vmem:[#allocation6 + $0x680] sm:$0xff]
    %v313 = vld [vmem:[#allocation6 + $0x688] sm:$0xff]
    %v314 = vld [vmem:[#allocation6 + $0x690] sm:$0xff]
    %v315 = vld [vmem:[#allocation6 + $0x698] sm:$0xff]
    %v316 = vld [vmem:[#allocation6 + $0x6a0] sm:$0xff]
    %v317 = vld [vmem:[#allocation6 + $0x6a8] sm:$0xff]
    %v318 = vld [vmem:[#allocation6 + $0x6b0] sm:$0xff]
    %v319 = vld [vmem:[#allocation6 + $0x6b8] sm:$0xff]
    %v320 = vld [vmem:[#allocation6 + $0x6c0] sm:$0xff]
    %v321 = vld [vmem:[#allocation6 + $0x6c8] sm:$0xff]
    %v322 = vld [vmem:[#allocation6 + $0x6d0] sm:$0xff]
    %v323 = vld [vmem:[#allocation6 + $0x6d8] sm:$0xff]
    %v324 = vld [vmem:[#allocation6 + $0x6e0] sm:$0xff]
    %v325 = vld [vmem:[#allocation6 + $0x6e8] sm:$0xff]
    %v326 = vld [vmem:[#allocation6 + $0x6f0] sm:$0xff]
    %v327 = vld [vmem:[#allocation6 + $0x6f8] sm:$0xff]
    %v328 = vld [vmem:[#allocation6 + $0x700] sm:$0xff]
    %v329 = vld [vmem:[#allocation6 + $0x708] sm:$0xff]
    %v330 = vld [vmem:[#allocation6 + $0x710] sm:$0xff]
    %v331 = vld [vmem:[#allocation6 + $0x718] sm:$0xff]
    %v332 = vld [vmem:[#allocation6 + $0x720] sm:$0xff]
    %v333 = vld [vmem:[#allocation6 + $0x728] sm:$0xff]
    %v334 = vld [vmem:[#allocation6 + $0x730] sm:$0xff]
    %v335 = vld [vmem:[#allocation6 + $0x738] sm:$0xff]
    %v336 = vld [vmem:[#allocation6 + $0x740] sm:$0xff]
    %v337 = vld [vmem:[#allocation6 + $0x748] sm:$0xff]
    %v338 = vld [vmem:[#allocation6 + $0x750] sm:$0xff]
    %v339 = vld [vmem:[#allocation6 + $0x758] sm:$0xff]
    %v340 = vld [vmem:[#allocation6 + $0x760] sm:$0xff]
    %v341 = vld [vmem:[#allocation6 + $0x768] sm:$0xff]
    %v342 = vld [vmem:[#allocation6 + $0x770] sm:$0xff]
    %v343 = vld [vmem:[#allocation6 + $0x778] sm:$0xff]
    %v344 = vld [vmem:[#allocation6 + $0x780] sm:$0xff]
    %v345 = vld [vmem:[#allocation6 + $0x788] sm:$0xff]
    %v346 = vld [vmem:[#allocation6 + $0x790] sm:$0xff]
    %v347 = vld [vmem:[#allocation6 + $0x798] sm:$0xff]
    %v348 = vld [vmem:[#allocation6 + $0x7a0] sm:$0xff]
    %v349 = vld [vmem:[#allocation6 + $0x7a8] sm:$0xff]
    %v350 = vld [vmem:[#allocation6 + $0x7b0] sm:$0xff]
    %v351 = vld [vmem:[#allocation6 + $0x7b8] sm:$0xff]
    %v352 = vld [vmem:[#allocation6 + $0x7c0] sm:$0xff]
    %v353 = vld [vmem:[#allocation6 + $0x7c8] sm:$0xff]
    %v354 = vld [vmem:[#allocation6 + $0x7d0] sm:$0xff]
    %v355 = vld [vmem:[#allocation6 + $0x7d8] sm:$0xff]
    %v356 = vld [vmem:[#allocation6 + $0x7e0] sm:$0xff]
    %v357 = vld [vmem:[#allocation6 + $0x7e8] sm:$0xff]
    %v358 = vld [vmem:[#allocation6 + $0x7f0] sm:$0xff]
    %v359 = vld [vmem:[#allocation6 + $0x7f8] sm:$0xff]
    %v360 = vld [vmem:[#allocation6 + $0x800] sm:$0xff]
    %v361 = vld [vmem:[#allocation6 + $0x808] sm:$0xff]
    %v362 = vld [vmem:[#allocation6 + $0x810] sm:$0xff]
    %v363 = vld [vmem:[#allocation6 + $0x818] sm:$0xff]
    %v364 = vld [vmem:[#allocation6 + $0x820] sm:$0xff]
    %v365 = vld [vmem:[#allocation6 + $0x828] sm:$0xff]
    %v366 = vld [vmem:[#allocation6 + $0x830] sm:$0xff]
    %v367 = vld [vmem:[#allocation6 + $0x838] sm:$0xff]
    %v368 = vld [vmem:[#allocation6 + $0x840] sm:$0xff]
    %v369 = vld [vmem:[#allocation6 + $0x848] sm:$0xff]
    %v370 = vld [vmem:[#allocation6 + $0x850] sm:$0xff]
    %v371 = vld [vmem:[#allocation6 + $0x858] sm:$0xff]
    %v372 = vld [vmem:[#allocation6 + $0x860] sm:$0xff]
    %v373 = vld [vmem:[#allocation6 + $0x868] sm:$0xff]
    %v374 = vld [vmem:[#allocation6 + $0x870] sm:$0xff]
    %v375 = vld [vmem:[#allocation6 + $0x878] sm:$0xff]
    %v376 = vld [vmem:[#allocation6 + $0x880] sm:$0xff]
    %v377 = vld [vmem:[#allocation6 + $0x888] sm:$0xff]
    %v378 = vld [vmem:[#allocation6 + $0x890] sm:$0xff]
    %v379 = vld [vmem:[#allocation6 + $0x898] sm:$0xff]
    %v380 = vld [vmem:[#allocation6 + $0x8a0] sm:$0xff]
    %v381 = vld [vmem:[#allocation6 + $0x8a8] sm:$0xff]
    %v382 = vld [vmem:[#allocation6 + $0x8b0] sm:$0xff]
    %v383 = vld [vmem:[#allocation6 + $0x8b8] sm:$0xff]
    %v384 = vld [vmem:[#allocation6 + $0x8c0] sm:$0xff]
    %v385 = vld [vmem:[#allocation6 + $0x8c8] sm:$0xff]
    %v386 = vld [vmem:[#allocation6 + $0x8d0] sm:$0xff]
    %v387 = vld [vmem:[#allocation6 + $0x8d8] sm:$0xff]
    %v388 = vld [vmem:[#allocation6 + $0x8e0] sm:$0xff]
    %v389 = vld [vmem:[#allocation6 + $0x8e8] sm:$0xff]
    %v390 = vld [vmem:[#allocation6 + $0x8f0] sm:$0xff]
    %v391 = vld [vmem:[#allocation6 + $0x8f8] sm:$0xff]
    %v392 = vld [vmem:[#allocation6 + $0x900] sm:$0xff]
    %v393 = vld [vmem:[#allocation6 + $0x908] sm:$0xff]
    %v394 = vld [vmem:[#allocation6 + $0x910] sm:$0xff]
    %v395 = vld [vmem:[#allocation6 + $0x918] sm:$0xff]
    %v396 = vld [vmem:[#allocation6 + $0x920] sm:$0xff]
    %v397 = vld [vmem:[#allocation6 + $0x928] sm:$0xff]
    %v398 = vld [vmem:[#allocation6 + $0x930] sm:$0xff]
    %v399 = vld [vmem:[#allocation6 + $0x938] sm:$0xff]
    %v400 = vld [vmem:[#allocation6 + $0x940] sm:$0xff]
    %v401 = vld [vmem:[#allocation6 + $0x948] sm:$0xff]
    %v402 = vld [vmem:[#allocation6 + $0x950] sm:$0xff]
    %v403 = vld [vmem:[#allocation6 + $0x958] sm:$0xff]
    %v404 = vld [vmem:[#allocation6 + $0x960] sm:$0xff]
    %v405 = vld [vmem:[#allocation6 + $0x968] sm:$0xff]
    %v406 = vld [vmem:[#allocation6 + $0x970] sm:$0xff]
    %v407 = vld [vmem:[#allocation6 + $0x978] sm:$0xff]
    %v408 = vld [vmem:[#allocation6 + $0x980] sm:$0xff]
    %v409 = vld [vmem:[#allocation6 + $0x988] sm:$0xff]
    %v410 = vld [vmem:[#allocation6 + $0x990] sm:$0xff]
    %v411 = vld [vmem:[#allocation6 + $0x998] sm:$0xff]
    %v412 = vld [vmem:[#allocation6 + $0x9a0] sm:$0xff]
    %v413 = vld [vmem:[#allocation6 + $0x9a8] sm:$0xff]
    %v414 = vld [vmem:[#allocation6 + $0x9b0] sm:$0xff]
    %v415 = vld [vmem:[#allocation6 + $0x9b8] sm:$0xff]
    %v416 = vld [vmem:[#allocation6 + $0x9c0] sm:$0xff]
    %v417 = vld [vmem:[#allocation6 + $0x9c8] sm:$0xff]
    %v418 = vld [vmem:[#allocation6 + $0x9d0] sm:$0xff]
    %v419 = vld [vmem:[#allocation6 + $0x9d8] sm:$0xff]
    %v420 = vld [vmem:[#allocation6 + $0x9e0] sm:$0xff]
    %v421 = vld [vmem:[#allocation6 + $0x9e8] sm:$0xff]
    %v422 = vld [vmem:[#allocation6 + $0x9f0] sm:$0xff]
    %v423 = vld [vmem:[#allocation6 + $0x9f8] sm:$0xff]
    %v424 = vld [vmem:[#allocation6 + $0xa00] sm:$0xff]
    %v425 = vld [vmem:[#allocation6 + $0xa08] sm:$0xff]
    %v426 = vld [vmem:[#allocation6 + $0xa10] sm:$0xff]
    %v427 = vld [vmem:[#allocation6 + $0xa18] sm:$0xff]
    %v428 = vld [vmem:[#allocation6 + $0xa20] sm:$0xff]
    %v429 = vld [vmem:[#allocation6 + $0xa28] sm:$0xff]
    %v430 = vld [vmem:[#allocation6 + $0xa30] sm:$0xff]
    %v431 = vld [vmem:[#allocation6 + $0xa38] sm:$0xff]
    %v432 = vld [vmem:[#allocation6 + $0xa40] sm:$0xff]
    %v433 = vld [vmem:[#allocation6 + $0xa48] sm:$0xff]
    %v434 = vld [vmem:[#allocation6 + $0xa50] sm:$0xff]
    %v435 = vld [vmem:[#allocation6 + $0xa58] sm:$0xff]
    %v436 = vld [vmem:[#allocation6 + $0xa60] sm:$0xff]
    %v437 = vld [vmem:[#allocation6 + $0xa68] sm:$0xff]
    %v438 = vld [vmem:[#allocation6 + $0xa70] sm:$0xff]
    %v439 = vld [vmem:[#allocation6 + $0xa78] sm:$0xff]
    %v440 = vld [vmem:[#allocation6 + $0xa80] sm:$0xff]
    %v441 = vld [vmem:[#allocation6 + $0xa88] sm:$0xff]
    %v442 = vld [vmem:[#allocation6 + $0xa90] sm:$0xff]
    %v443 = vld [vmem:[#allocation6 + $0xa98] sm:$0xff]
    %v444 = vld [vmem:[#allocation6 + $0xaa0] sm:$0xff]
    %v445 = vld [vmem:[#allocation6 + $0xaa8] sm:$0xff]
    %v446 = vld [vmem:[#allocation6 + $0xab0] sm:$0xff]
    %v447 = vld [vmem:[#allocation6 + $0xab8] sm:$0xff]
    %v448 = vld [vmem:[#allocation6 + $0xac0] sm:$0xff]
    %v449 = vld [vmem:[#allocation6 + $0xac8] sm:$0xff]
    %v450 = vld [vmem:[#allocation6 + $0xad0] sm:$0xff]
    %v451 = vld [vmem:[#allocation6 + $0xad8] sm:$0xff]
    %v452 = vld [vmem:[#allocation6 + $0xae0] sm:$0xff]
    %v453 = vld [vmem:[#allocation6 + $0xae8] sm:$0xff]
    %v454 = vld [vmem:[#allocation6 + $0xaf0] sm:$0xff]
    %v455 = vld [vmem:[#allocation6 + $0xaf8] sm:$0xff]
    %v456 = vld [vmem:[#allocation6 + $0xb00] sm:$0xff]
    %v457 = vld [vmem:[#allocation6 + $0xb08] sm:$0xff]
    %v458 = vld [vmem:[#allocation6 + $0xb10] sm:$0xff]
    %v459 = vld [vmem:[#allocation6 + $0xb18] sm:$0xff]
    %v460 = vld [vmem:[#allocation6 + $0xb20] sm:$0xff]
    %v461 = vld [vmem:[#allocation6 + $0xb28] sm:$0xff]
    %v462 = vld [vmem:[#allocation6 + $0xb30] sm:$0xff]
    %v463 = vld [vmem:[#allocation6 + $0xb38] sm:$0xff]
    %v464 = vld [vmem:[#allocation6 + $0xb40] sm:$0xff]
    %v465 = vld [vmem:[#allocation6 + $0xb48] sm:$0xff]
    %v466 = vld [vmem:[#allocation6 + $0xb50] sm:$0xff]
    %v467 = vld [vmem:[#allocation6 + $0xb58] sm:$0xff]
    %v468 = vld [vmem:[#allocation6 + $0xb60] sm:$0xff]
    %v469 = vld [vmem:[#allocation6 + $0xb68] sm:$0xff]
    %v470 = vld [vmem:[#allocation6 + $0xb70] sm:$0xff]
    %v471 = vld [vmem:[#allocation6 + $0xb78] sm:$0xff]
    %v472 = vld [vmem:[#allocation6 + $0xb80] sm:$0xff]
    %v473 = vld [vmem:[#allocation6 + $0xb88] sm:$0xff]
    %v474 = vld [vmem:[#allocation6 + $0xb90] sm:$0xff]
    %v475 = vld [vmem:[#allocation6 + $0xb98] sm:$0xff]
    %v476 = vld [vmem:[#allocation6 + $0xba0] sm:$0xff]
    %v477 = vld [vmem:[#allocation6 + $0xba8] sm:$0xff]
    %v478 = vld [vmem:[#allocation6 + $0xbb0] sm:$0xff]
    %v479 = vld [vmem:[#allocation6 + $0xbb8] sm:$0xff]
    %v480 = vld [vmem:[#allocation6 + $0xbc0] sm:$0xff]
    %v481 = vld [vmem:[#allocation6 + $0xbc8] sm:$0xff]
    %v482 = vld [vmem:[#allocation6 + $0xbd0] sm:$0xff]
    %v483 = vld [vmem:[#allocation6 + $0xbd8] sm:$0xff]
    %v484 = vld [vmem:[#allocation6 + $0xbe0] sm:$0xff]
    %v485 = vld [vmem:[#allocation6 + $0xbe8] sm:$0xff]
    %v486 = vld [vmem:[#allocation6 + $0xbf0] sm:$0xff]
    %v487 = vld [vmem:[#allocation6 + $0xbf8] sm:$0xff]
    %v488 = vld [vmem:[#allocation8] sm:$0xf]
    %v490 = vperm.slane %v488, 0
    %v491 = vperm.slane %v488, 1
    %v492 = vperm.slane %v488, 2
    %v493 = vperm.slane %v488, 3
    %v882 = vunpack.c.l.b16 %v104
    %v883 = vunpack.c.h.b16 %v104
    %v884 = vunpack.c.l.b16 %v105
    %v885 = vunpack.c.h.b16 %v105
    %v886 = vunpack.c.l.b16 %v106
    %v887 = vunpack.c.h.b16 %v106
    %v888 = vunpack.c.l.b16 %v107
    %v889 = vunpack.c.h.b16 %v107
    %v890 = vunpack.c.l.b16 %v108
    %v891 = vunpack.c.h.b16 %v108
    %v892 = vunpack.c.l.b16 %v109
    %v893 = vunpack.c.h.b16 %v109
    %v894 = vunpack.c.l.b16 %v110
    %v895 = vunpack.c.h.b16 %v110
    %v896 = vunpack.c.l.b16 %v111
    %v897 = vunpack.c.h.b16 %v111
    %v898 = vunpack.c.l.b16 %v112
    %v899 = vunpack.c.h.b16 %v112
    %v900 = vunpack.c.l.b16 %v113
    %v901 = vunpack.c.h.b16 %v113
    %v902 = vunpack.c.l.b16 %v114
    %v903 = vunpack.c.h.b16 %v114
    %v904 = vunpack.c.l.b16 %v115
    %v905 = vunpack.c.h.b16 %v115
    %v906 = vunpack.c.l.b16 %v116
    %v907 = vunpack.c.h.b16 %v116
    %v908 = vunpack.c.l.b16 %v117
    %v909 = vunpack.c.h.b16 %v117
    %v910 = vunpack.c.l.b16 %v118
    %v911 = vunpack.c.h.b16 %v118
    %v912 = vunpack.c.l.b16 %v119
    %v913 = vunpack.c.h.b16 %v119
    %v914 = vunpack.c.l.b16 %v120
    %v915 = vunpack.c.h.b16 %v120
    %v916 = vunpack.c.l.b16 %v121
    %v917 = vunpack.c.h.b16 %v121
    %v918 = vunpack.c.l.b16 %v122
    %v919 = vunpack.c.h.b16 %v122
    %v920 = vunpack.c.l.b16 %v123
    %v921 = vunpack.c.h.b16 %v123
    %v922 = vunpack.c.l.b16 %v124
    %v923 = vunpack.c.h.b16 %v124
    %v924 = vunpack.c.l.b16 %v125
    %v925 = vunpack.c.h.b16 %v125
    %v926 = vunpack.c.l.b16 %v126
    %v927 = vunpack.c.h.b16 %v126
    %v928 = vunpack.c.l.b16 %v127
    %v929 = vunpack.c.h.b16 %v127
    %v930 = vunpack.c.l.b16 %v128
    %v931 = vunpack.c.h.b16 %v128
    %v932 = vunpack.c.l.b16 %v129
    %v933 = vunpack.c.h.b16 %v129
    %v934 = vunpack.c.l.b16 %v130
    %v935 = vunpack.c.h.b16 %v130
    %v936 = vunpack.c.l.b16 %v131
    %v937 = vunpack.c.h.b16 %v131
    %v938 = vunpack.c.l.b16 %v132
    %v939 = vunpack.c.h.b16 %v132
    %v940 = vunpack.c.l.b16 %v133
    %v941 = vunpack.c.h.b16 %v133
    %v942 = vunpack.c.l.b16 %v134
    %v943 = vunpack.c.h.b16 %v134
    %v944 = vunpack.c.l.b16 %v135
    %v945 = vunpack.c.h.b16 %v135
    %v946 = vunpack.c.l.b16 %v136
    %v947 = vunpack.c.h.b16 %v136
    %v948 = vunpack.c.l.b16 %v137
    %v949 = vunpack.c.h.b16 %v137
    %v950 = vunpack.c.l.b16 %v138
    %v951 = vunpack.c.h.b16 %v138
    %v952 = vunpack.c.l.b16 %v139
    %v953 = vunpack.c.h.b16 %v139
    %v954 = vunpack.c.l.b16 %v140
    %v955 = vunpack.c.h.b16 %v140
    %v956 = vunpack.c.l.b16 %v141
    %v957 = vunpack.c.h.b16 %v141
    %v958 = vunpack.c.l.b16 %v142
    %v959 = vunpack.c.h.b16 %v142
    %v960 = vunpack.c.l.b16 %v143
    %v961 = vunpack.c.h.b16 %v143
    %v962 = vunpack.c.l.b16 %v144
    %v963 = vunpack.c.h.b16 %v144
    %v964 = vunpack.c.l.b16 %v145
    %v965 = vunpack.c.h.b16 %v145
    %v966 = vunpack.c.l.b16 %v146
    %v967 = vunpack.c.h.b16 %v146
    %v968 = vunpack.c.l.b16 %v147
    %v969 = vunpack.c.h.b16 %v147
    %v970 = vunpack.c.l.b16 %v148
    %v971 = vunpack.c.h.b16 %v148
    %v972 = vunpack.c.l.b16 %v149
    %v973 = vunpack.c.h.b16 %v149
    %v974 = vunpack.c.l.b16 %v150
    %v975 = vunpack.c.h.b16 %v150
    %v976 = vunpack.c.l.b16 %v151
    %v977 = vunpack.c.h.b16 %v151
    %v978 = vunpack.c.l.b16 %v152
    %v979 = vunpack.c.h.b16 %v152
    %v980 = vunpack.c.l.b16 %v153
    %v981 = vunpack.c.h.b16 %v153
    %v982 = vunpack.c.l.b16 %v154
    %v983 = vunpack.c.h.b16 %v154
    %v984 = vunpack.c.l.b16 %v155
    %v985 = vunpack.c.h.b16 %v155
    %v986 = vunpack.c.l.b16 %v156
    %v987 = vunpack.c.h.b16 %v156
    %v988 = vunpack.c.l.b16 %v157
    %v989 = vunpack.c.h.b16 %v157
    %v990 = vunpack.c.l.b16 %v158
    %v991 = vunpack.c.h.b16 %v158
    %v992 = vunpack.c.l.b16 %v159
    %v993 = vunpack.c.h.b16 %v159
    %v994 = vunpack.c.l.b16 %v160
    %v995 = vunpack.c.h.b16 %v160
    %v996 = vunpack.c.l.b16 %v161
    %v997 = vunpack.c.h.b16 %v161
    %v998 = vunpack.c.l.b16 %v162
    %v999 = vunpack.c.h.b16 %v162
    %v1000 = vunpack.c.l.b16 %v163
    %v1001 = vunpack.c.h.b16 %v163
    %v1002 = vunpack.c.l.b16 %v164
    %v1003 = vunpack.c.h.b16 %v164
    %v1004 = vunpack.c.l.b16 %v165
    %v1005 = vunpack.c.h.b16 %v165
    %v1006 = vunpack.c.l.b16 %v166
    %v1007 = vunpack.c.h.b16 %v166
    %v1008 = vunpack.c.l.b16 %v167
    %v1009 = vunpack.c.h.b16 %v167
    %v1010 = vunpack.c.l.b16 %v168
    %v1011 = vunpack.c.h.b16 %v168
    %v1012 = vunpack.c.l.b16 %v169
    %v1013 = vunpack.c.h.b16 %v169
    %v1014 = vunpack.c.l.b16 %v170
    %v1015 = vunpack.c.h.b16 %v170
    %v1016 = vunpack.c.l.b16 %v171
    %v1017 = vunpack.c.h.b16 %v171
    %v1018 = vunpack.c.l.b16 %v172
    %v1019 = vunpack.c.h.b16 %v172
    %v1020 = vunpack.c.l.b16 %v173
    %v1021 = vunpack.c.h.b16 %v173
    %v1022 = vunpack.c.l.b16 %v174
    %v1023 = vunpack.c.h.b16 %v174
    %v1024 = vunpack.c.l.b16 %v175
    %v1025 = vunpack.c.h.b16 %v175
    %v1026 = vunpack.c.l.b16 %v176
    %v1027 = vunpack.c.h.b16 %v176
    %v1028 = vunpack.c.l.b16 %v177
    %v1029 = vunpack.c.h.b16 %v177
    %v1030 = vunpack.c.l.b16 %v178
    %v1031 = vunpack.c.h.b16 %v178
    %v1032 = vunpack.c.l.b16 %v179
    %v1033 = vunpack.c.h.b16 %v179
    %v1034 = vunpack.c.l.b16 %v180
    %v1035 = vunpack.c.h.b16 %v180
    %v1036 = vunpack.c.l.b16 %v181
    %v1037 = vunpack.c.h.b16 %v181
    %v1038 = vunpack.c.l.b16 %v182
    %v1039 = vunpack.c.h.b16 %v182
    %v1040 = vunpack.c.l.b16 %v183
    %v1041 = vunpack.c.h.b16 %v183
    %v1042 = vunpack.c.l.b16 %v184
    %v1043 = vunpack.c.h.b16 %v184
    %v1044 = vunpack.c.l.b16 %v185
    %v1045 = vunpack.c.h.b16 %v185
    %v1046 = vunpack.c.l.b16 %v186
    %v1047 = vunpack.c.h.b16 %v186
    %v1048 = vunpack.c.l.b16 %v187
    %v1049 = vunpack.c.h.b16 %v187
    %v1050 = vunpack.c.l.b16 %v188
    %v1051 = vunpack.c.h.b16 %v188
    %v1052 = vunpack.c.l.b16 %v189
    %v1053 = vunpack.c.h.b16 %v189
    %v1054 = vunpack.c.l.b16 %v190
    %v1055 = vunpack.c.h.b16 %v190
    %v1056 = vunpack.c.l.b16 %v191
    %v1057 = vunpack.c.h.b16 %v191
    %v1058 = vunpack.c.l.b16 %v192
    %v1059 = vunpack.c.h.b16 %v192
    %v1060 = vunpack.c.l.b16 %v193
    %v1061 = vunpack.c.h.b16 %v193
    %v1062 = vunpack.c.l.b16 %v194
    %v1063 = vunpack.c.h.b16 %v194
    %v1064 = vunpack.c.l.b16 %v195
    %v1065 = vunpack.c.h.b16 %v195
    %v1066 = vunpack.c.l.b16 %v196
    %v1067 = vunpack.c.h.b16 %v196
    %v1068 = vunpack.c.l.b16 %v197
    %v1069 = vunpack.c.h.b16 %v197
    %v1070 = vunpack.c.l.b16 %v198
    %v1071 = vunpack.c.h.b16 %v198
    %v1072 = vunpack.c.l.b16 %v199
    %v1073 = vunpack.c.h.b16 %v199
    %v1074 = vunpack.c.l.b16 %v200
    %v1075 = vunpack.c.h.b16 %v200
    %v1076 = vunpack.c.l.b16 %v201
    %v1077 = vunpack.c.h.b16 %v201
    %v1078 = vunpack.c.l.b16 %v202
    %v1079 = vunpack.c.h.b16 %v202
    %v1080 = vunpack.c.l.b16 %v203
    %v1081 = vunpack.c.h.b16 %v203
    %v1082 = vunpack.c.l.b16 %v204
    %v1083 = vunpack.c.h.b16 %v204
    %v1084 = vunpack.c.l.b16 %v205
    %v1085 = vunpack.c.h.b16 %v205
    %v1086 = vunpack.c.l.b16 %v206
    %v1087 = vunpack.c.h.b16 %v206
    %v1088 = vunpack.c.l.b16 %v207
    %v1089 = vunpack.c.h.b16 %v207
    %v1090 = vunpack.c.l.b16 %v208
    %v1091 = vunpack.c.h.b16 %v208
    %v1092 = vunpack.c.l.b16 %v209
    %v1093 = vunpack.c.h.b16 %v209
    %v1094 = vunpack.c.l.b16 %v210
    %v1095 = vunpack.c.h.b16 %v210
    %v1096 = vunpack.c.l.b16 %v211
    %v1097 = vunpack.c.h.b16 %v211
    %v1098 = vunpack.c.l.b16 %v212
    %v1099 = vunpack.c.h.b16 %v212
    %v1100 = vunpack.c.l.b16 %v213
    %v1101 = vunpack.c.h.b16 %v213
    %v1102 = vunpack.c.l.b16 %v214
    %v1103 = vunpack.c.h.b16 %v214
    %v1104 = vunpack.c.l.b16 %v215
    %v1105 = vunpack.c.h.b16 %v215
    %v1106 = vunpack.c.l.b16 %v216
    %v1107 = vunpack.c.h.b16 %v216
    %v1108 = vunpack.c.l.b16 %v217
    %v1109 = vunpack.c.h.b16 %v217
    %v1110 = vunpack.c.l.b16 %v218
    %v1111 = vunpack.c.h.b16 %v218
    %v1112 = vunpack.c.l.b16 %v219
    %v1113 = vunpack.c.h.b16 %v219
    %v1114 = vunpack.c.l.b16 %v220
    %v1115 = vunpack.c.h.b16 %v220
    %v1116 = vunpack.c.l.b16 %v221
    %v1117 = vunpack.c.h.b16 %v221
    %v1118 = vunpack.c.l.b16 %v222
    %v1119 = vunpack.c.h.b16 %v222
    %v1120 = vunpack.c.l.b16 %v223
    %v1121 = vunpack.c.h.b16 %v223
    %v1122 = vunpack.c.l.b16 %v224
    %v1123 = vunpack.c.h.b16 %v224
    %v1124 = vunpack.c.l.b16 %v225
    %v1125 = vunpack.c.h.b16 %v225
    %v1126 = vunpack.c.l.b16 %v226
    %v1127 = vunpack.c.h.b16 %v226
    %v1128 = vunpack.c.l.b16 %v227
    %v1129 = vunpack.c.h.b16 %v227
    %v1130 = vunpack.c.l.b16 %v228
    %v1131 = vunpack.c.h.b16 %v228
    %v1132 = vunpack.c.l.b16 %v229
    %v1133 = vunpack.c.h.b16 %v229
    %v1134 = vunpack.c.l.b16 %v230
    %v1135 = vunpack.c.h.b16 %v230
    %v1136 = vunpack.c.l.b16 %v231
    %v1137 = vunpack.c.h.b16 %v231
    %v1138 = vunpack.c.l.b16 %v232
    %v1139 = vunpack.c.h.b16 %v232
    %v1140 = vunpack.c.l.b16 %v233
    %v1141 = vunpack.c.h.b16 %v233
    %v1142 = vunpack.c.l.b16 %v234
    %v1143 = vunpack.c.h.b16 %v234
    %v1144 = vunpack.c.l.b16 %v235
    %v1145 = vunpack.c.h.b16 %v235
    %v1146 = vunpack.c.l.b16 %v236
    %v1147 = vunpack.c.h.b16 %v236
    %v1148 = vunpack.c.l.b16 %v237
    %v1149 = vunpack.c.h.b16 %v237
    %v1150 = vunpack.c.l.b16 %v238
    %v1151 = vunpack.c.h.b16 %v238
    %v1152 = vunpack.c.l.b16 %v239
    %v1153 = vunpack.c.h.b16 %v239
    %v1154 = vunpack.c.l.b16 %v240
    %v1155 = vunpack.c.h.b16 %v240
    %v1156 = vunpack.c.l.b16 %v241
    %v1157 = vunpack.c.h.b16 %v241
    %v1158 = vunpack.c.l.b16 %v242
    %v1159 = vunpack.c.h.b16 %v242
    %v1160 = vunpack.c.l.b16 %v243
    %v1161 = vunpack.c.h.b16 %v243
    %v1162 = vunpack.c.l.b16 %v244
    %v1163 = vunpack.c.h.b16 %v244
    %v1164 = vunpack.c.l.b16 %v245
    %v1165 = vunpack.c.h.b16 %v245
    %v1166 = vunpack.c.l.b16 %v246
    %v1167 = vunpack.c.h.b16 %v246
    %v1168 = vunpack.c.l.b16 %v247
    %v1169 = vunpack.c.h.b16 %v247
    %v1170 = vunpack.c.l.b16 %v248
    %v1171 = vunpack.c.h.b16 %v248
    %v1172 = vunpack.c.l.b16 %v249
    %v1173 = vunpack.c.h.b16 %v249
    %v1174 = vunpack.c.l.b16 %v250
    %v1175 = vunpack.c.h.b16 %v250
    %v1176 = vunpack.c.l.b16 %v251
    %v1177 = vunpack.c.h.b16 %v251
    %v1178 = vunpack.c.l.b16 %v252
    %v1179 = vunpack.c.h.b16 %v252
    %v1180 = vunpack.c.l.b16 %v253
    %v1181 = vunpack.c.h.b16 %v253
    %v1182 = vunpack.c.l.b16 %v254
    %v1183 = vunpack.c.h.b16 %v254
    %v1184 = vunpack.c.l.b16 %v255
    %v1185 = vunpack.c.h.b16 %v255
    %v1186 = vunpack.c.l.b16 %v256
    %v1187 = vunpack.c.h.b16 %v256
    %v1188 = vunpack.c.l.b16 %v257
    %v1189 = vunpack.c.h.b16 %v257
    %v1190 = vunpack.c.l.b16 %v258
    %v1191 = vunpack.c.h.b16 %v258
    %v1192 = vunpack.c.l.b16 %v259
    %v1193 = vunpack.c.h.b16 %v259
    %v1194 = vunpack.c.l.b16 %v260
    %v1195 = vunpack.c.h.b16 %v260
    %v1196 = vunpack.c.l.b16 %v261
    %v1197 = vunpack.c.h.b16 %v261
    %v1198 = vunpack.c.l.b16 %v262
    %v1199 = vunpack.c.h.b16 %v262
    %v1200 = vunpack.c.l.b16 %v263
    %v1201 = vunpack.c.h.b16 %v263
    %v1202 = vunpack.c.l.b16 %v264
    %v1203 = vunpack.c.h.b16 %v264
    %v1204 = vunpack.c.l.b16 %v265
    %v1205 = vunpack.c.h.b16 %v265
    %v1206 = vunpack.c.l.b16 %v266
    %v1207 = vunpack.c.h.b16 %v266
    %v1208 = vunpack.c.l.b16 %v267
    %v1209 = vunpack.c.h.b16 %v267
    %v1210 = vunpack.c.l.b16 %v268
    %v1211 = vunpack.c.h.b16 %v268
    %v1212 = vunpack.c.l.b16 %v269
    %v1213 = vunpack.c.h.b16 %v269
    %v1214 = vunpack.c.l.b16 %v270
    %v1215 = vunpack.c.h.b16 %v270
    %v1216 = vunpack.c.l.b16 %v271
    %v1217 = vunpack.c.h.b16 %v271
    %v1218 = vunpack.c.l.b16 %v272
    %v1219 = vunpack.c.h.b16 %v272
    %v1220 = vunpack.c.l.b16 %v273
    %v1221 = vunpack.c.h.b16 %v273
    %v1222 = vunpack.c.l.b16 %v274
    %v1223 = vunpack.c.h.b16 %v274
    %v1224 = vunpack.c.l.b16 %v275
    %v1225 = vunpack.c.h.b16 %v275
    %v1226 = vunpack.c.l.b16 %v276
    %v1227 = vunpack.c.h.b16 %v276
    %v1228 = vunpack.c.l.b16 %v277
    %v1229 = vunpack.c.h.b16 %v277
    %v1230 = vunpack.c.l.b16 %v278
    %v1231 = vunpack.c.h.b16 %v278
    %v1232 = vunpack.c.l.b16 %v279
    %v1233 = vunpack.c.h.b16 %v279
    %v1234 = vunpack.c.l.b16 %v280
    %v1235 = vunpack.c.h.b16 %v280
    %v1236 = vunpack.c.l.b16 %v281
    %v1237 = vunpack.c.h.b16 %v281
    %v1238 = vunpack.c.l.b16 %v282
    %v1239 = vunpack.c.h.b16 %v282
    %v1240 = vunpack.c.l.b16 %v283
    %v1241 = vunpack.c.h.b16 %v283
    %v1242 = vunpack.c.l.b16 %v284
    %v1243 = vunpack.c.h.b16 %v284
    %v1244 = vunpack.c.l.b16 %v285
    %v1245 = vunpack.c.h.b16 %v285
    %v1246 = vunpack.c.l.b16 %v286
    %v1247 = vunpack.c.h.b16 %v286
    %v1248 = vunpack.c.l.b16 %v287
    %v1249 = vunpack.c.h.b16 %v287
    %v1250 = vunpack.c.l.b16 %v288
    %v1251 = vunpack.c.h.b16 %v288
    %v1252 = vunpack.c.l.b16 %v289
    %v1253 = vunpack.c.h.b16 %v289
    %v1254 = vunpack.c.l.b16 %v290
    %v1255 = vunpack.c.h.b16 %v290
    %v1256 = vunpack.c.l.b16 %v291
    %v1257 = vunpack.c.h.b16 %v291
    %v1258 = vunpack.c.l.b16 %v292
    %v1259 = vunpack.c.h.b16 %v292
    %v1260 = vunpack.c.l.b16 %v293
    %v1261 = vunpack.c.h.b16 %v293
    %v1262 = vunpack.c.l.b16 %v294
    %v1263 = vunpack.c.h.b16 %v294
    %v1264 = vunpack.c.l.b16 %v295
    %v1265 = vunpack.c.h.b16 %v295
    %v1266 = vunpack.c.l.b16 %v296
    %v1267 = vunpack.c.h.b16 %v296
    %v1268 = vunpack.c.l.b16 %v297
    %v1269 = vunpack.c.h.b16 %v297
    %v1270 = vunpack.c.l.b16 %v298
    %v1271 = vunpack.c.h.b16 %v298
    %v1272 = vunpack.c.l.b16 %v299
    %v1273 = vunpack.c.h.b16 %v299
    %v1274 = vunpack.c.l.b16 %v300
    %v1275 = vunpack.c.h.b16 %v300
    %v1276 = vunpack.c.l.b16 %v301
    %v1277 = vunpack.c.h.b16 %v301
    %v1278 = vunpack.c.l.b16 %v302
    %v1279 = vunpack.c.h.b16 %v302
    %v1280 = vunpack.c.l.b16 %v303
    %v1281 = vunpack.c.h.b16 %v303
    %v1282 = vunpack.c.l.b16 %v304
    %v1283 = vunpack.c.h.b16 %v304
    %v1284 = vunpack.c.l.b16 %v305
    %v1285 = vunpack.c.h.b16 %v305
    %v1286 = vunpack.c.l.b16 %v306
    %v1287 = vunpack.c.h.b16 %v306
    %v1288 = vunpack.c.l.b16 %v307
    %v1289 = vunpack.c.h.b16 %v307
    %v1290 = vunpack.c.l.b16 %v308
    %v1291 = vunpack.c.h.b16 %v308
    %v1292 = vunpack.c.l.b16 %v309
    %v1293 = vunpack.c.h.b16 %v309
    %v1294 = vunpack.c.l.b16 %v310
    %v1295 = vunpack.c.h.b16 %v310
    %v1296 = vunpack.c.l.b16 %v311
    %v1297 = vunpack.c.h.b16 %v311
    %v1298 = vunpack.c.l.b16 %v312
    %v1299 = vunpack.c.h.b16 %v312
    %v1300 = vunpack.c.l.b16 %v313
    %v1301 = vunpack.c.h.b16 %v313
    %v1302 = vunpack.c.l.b16 %v314
    %v1303 = vunpack.c.h.b16 %v314
    %v1304 = vunpack.c.l.b16 %v315
    %v1305 = vunpack.c.h.b16 %v315
    %v1306 = vunpack.c.l.b16 %v316
    %v1307 = vunpack.c.h.b16 %v316
    %v1308 = vunpack.c.l.b16 %v317
    %v1309 = vunpack.c.h.b16 %v317
    %v1310 = vunpack.c.l.b16 %v318
    %v1311 = vunpack.c.h.b16 %v318
    %v1312 = vunpack.c.l.b16 %v319
    %v1313 = vunpack.c.h.b16 %v319
    %v1314 = vunpack.c.l.b16 %v320
    %v1315 = vunpack.c.h.b16 %v320
    %v1316 = vunpack.c.l.b16 %v321
    %v1317 = vunpack.c.h.b16 %v321
    %v1318 = vunpack.c.l.b16 %v322
    %v1319 = vunpack.c.h.b16 %v322
    %v1320 = vunpack.c.l.b16 %v323
    %v1321 = vunpack.c.h.b16 %v323
    %v1322 = vunpack.c.l.b16 %v324
    %v1323 = vunpack.c.h.b16 %v324
    %v1324 = vunpack.c.l.b16 %v325
    %v1325 = vunpack.c.h.b16 %v325
    %v1326 = vunpack.c.l.b16 %v326
    %v1327 = vunpack.c.h.b16 %v326
    %v1328 = vunpack.c.l.b16 %v327
    %v1329 = vunpack.c.h.b16 %v327
    %v1330 = vunpack.c.l.b16 %v328
    %v1331 = vunpack.c.h.b16 %v328
    %v1332 = vunpack.c.l.b16 %v329
    %v1333 = vunpack.c.h.b16 %v329
    %v1334 = vunpack.c.l.b16 %v330
    %v1335 = vunpack.c.h.b16 %v330
    %v1336 = vunpack.c.l.b16 %v331
    %v1337 = vunpack.c.h.b16 %v331
    %v1338 = vunpack.c.l.b16 %v332
    %v1339 = vunpack.c.h.b16 %v332
    %v1340 = vunpack.c.l.b16 %v333
    %v1341 = vunpack.c.h.b16 %v333
    %v1342 = vunpack.c.l.b16 %v334
    %v1343 = vunpack.c.h.b16 %v334
    %v1344 = vunpack.c.l.b16 %v335
    %v1345 = vunpack.c.h.b16 %v335
    %v1346 = vunpack.c.l.b16 %v336
    %v1347 = vunpack.c.h.b16 %v336
    %v1348 = vunpack.c.l.b16 %v337
    %v1349 = vunpack.c.h.b16 %v337
    %v1350 = vunpack.c.l.b16 %v338
    %v1351 = vunpack.c.h.b16 %v338
    %v1352 = vunpack.c.l.b16 %v339
    %v1353 = vunpack.c.h.b16 %v339
    %v1354 = vunpack.c.l.b16 %v340
    %v1355 = vunpack.c.h.b16 %v340
    %v1356 = vunpack.c.l.b16 %v341
    %v1357 = vunpack.c.h.b16 %v341
    %v1358 = vunpack.c.l.b16 %v342
    %v1359 = vunpack.c.h.b16 %v342
    %v1360 = vunpack.c.l.b16 %v343
    %v1361 = vunpack.c.h.b16 %v343
    %v1362 = vunpack.c.l.b16 %v344
    %v1363 = vunpack.c.h.b16 %v344
    %v1364 = vunpack.c.l.b16 %v345
    %v1365 = vunpack.c.h.b16 %v345
    %v1366 = vunpack.c.l.b16 %v346
    %v1367 = vunpack.c.h.b16 %v346
    %v1368 = vunpack.c.l.b16 %v347
    %v1369 = vunpack.c.h.b16 %v347
    %v1370 = vunpack.c.l.b16 %v348
    %v1371 = vunpack.c.h.b16 %v348
    %v1372 = vunpack.c.l.b16 %v349
    %v1373 = vunpack.c.h.b16 %v349
    %v1374 = vunpack.c.l.b16 %v350
    %v1375 = vunpack.c.h.b16 %v350
    %v1376 = vunpack.c.l.b16 %v351
    %v1377 = vunpack.c.h.b16 %v351
    %v1378 = vunpack.c.l.b16 %v352
    %v1379 = vunpack.c.h.b16 %v352
    %v1380 = vunpack.c.l.b16 %v353
    %v1381 = vunpack.c.h.b16 %v353
    %v1382 = vunpack.c.l.b16 %v354
    %v1383 = vunpack.c.h.b16 %v354
    %v1384 = vunpack.c.l.b16 %v355
    %v1385 = vunpack.c.h.b16 %v355
    %v1386 = vunpack.c.l.b16 %v356
    %v1387 = vunpack.c.h.b16 %v356
    %v1388 = vunpack.c.l.b16 %v357
    %v1389 = vunpack.c.h.b16 %v357
    %v1390 = vunpack.c.l.b16 %v358
    %v1391 = vunpack.c.h.b16 %v358
    %v1392 = vunpack.c.l.b16 %v359
    %v1393 = vunpack.c.h.b16 %v359
    %v1394 = vunpack.c.l.b16 %v360
    %v1395 = vunpack.c.h.b16 %v360
    %v1396 = vunpack.c.l.b16 %v361
    %v1397 = vunpack.c.h.b16 %v361
    %v1398 = vunpack.c.l.b16 %v362
    %v1399 = vunpack.c.h.b16 %v362
    %v1400 = vunpack.c.l.b16 %v363
    %v1401 = vunpack.c.h.b16 %v363
    %v1402 = vunpack.c.l.b16 %v364
    %v1403 = vunpack.c.h.b16 %v364
    %v1404 = vunpack.c.l.b16 %v365
    %v1405 = vunpack.c.h.b16 %v365
    %v1406 = vunpack.c.l.b16 %v366
    %v1407 = vunpack.c.h.b16 %v366
    %v1408 = vunpack.c.l.b16 %v367
    %v1409 = vunpack.c.h.b16 %v367
    %v1410 = vunpack.c.l.b16 %v368
    %v1411 = vunpack.c.h.b16 %v368
    %v1412 = vunpack.c.l.b16 %v369
    %v1413 = vunpack.c.h.b16 %v369
    %v1414 = vunpack.c.l.b16 %v370
    %v1415 = vunpack.c.h.b16 %v370
    %v1416 = vunpack.c.l.b16 %v371
    %v1417 = vunpack.c.h.b16 %v371
    %v1418 = vunpack.c.l.b16 %v372
    %v1419 = vunpack.c.h.b16 %v372
    %v1420 = vunpack.c.l.b16 %v373
    %v1421 = vunpack.c.h.b16 %v373
    %v1422 = vunpack.c.l.b16 %v374
    %v1423 = vunpack.c.h.b16 %v374
    %v1424 = vunpack.c.l.b16 %v375
    %v1425 = vunpack.c.h.b16 %v375
    %v1426 = vunpack.c.l.b16 %v376
    %v1427 = vunpack.c.h.b16 %v376
    %v1428 = vunpack.c.l.b16 %v377
    %v1429 = vunpack.c.h.b16 %v377
    %v1430 = vunpack.c.l.b16 %v378
    %v1431 = vunpack.c.h.b16 %v378
    %v1432 = vunpack.c.l.b16 %v379
    %v1433 = vunpack.c.h.b16 %v379
    %v1434 = vunpack.c.l.b16 %v380
    %v1435 = vunpack.c.h.b16 %v380
    %v1436 = vunpack.c.l.b16 %v381
    %v1437 = vunpack.c.h.b16 %v381
    %v1438 = vunpack.c.l.b16 %v382
    %v1439 = vunpack.c.h.b16 %v382
    %v1440 = vunpack.c.l.b16 %v383
    %v1441 = vunpack.c.h.b16 %v383
    %v1442 = vunpack.c.l.b16 %v384
    %v1443 = vunpack.c.h.b16 %v384
    %v1444 = vunpack.c.l.b16 %v385
    %v1445 = vunpack.c.h.b16 %v385
    %v1446 = vunpack.c.l.b16 %v386
    %v1447 = vunpack.c.h.b16 %v386
    %v1448 = vunpack.c.l.b16 %v387
    %v1449 = vunpack.c.h.b16 %v387
    %v1450 = vunpack.c.l.b16 %v388
    %v1451 = vunpack.c.h.b16 %v388
    %v1452 = vunpack.c.l.b16 %v389
    %v1453 = vunpack.c.h.b16 %v389
    %v1454 = vunpack.c.l.b16 %v390
    %v1455 = vunpack.c.h.b16 %v390
    %v1456 = vunpack.c.l.b16 %v391
    %v1457 = vunpack.c.h.b16 %v391
    %v1458 = vunpack.c.l.b16 %v392
    %v1459 = vunpack.c.h.b16 %v392
    %v1460 = vunpack.c.l.b16 %v393
    %v1461 = vunpack.c.h.b16 %v393
    %v1462 = vunpack.c.l.b16 %v394
    %v1463 = vunpack.c.h.b16 %v394
    %v1464 = vunpack.c.l.b16 %v395
    %v1465 = vunpack.c.h.b16 %v395
    %v1466 = vunpack.c.l.b16 %v396
    %v1467 = vunpack.c.h.b16 %v396
    %v1468 = vunpack.c.l.b16 %v397
    %v1469 = vunpack.c.h.b16 %v397
    %v1470 = vunpack.c.l.b16 %v398
    %v1471 = vunpack.c.h.b16 %v398
    %v1472 = vunpack.c.l.b16 %v399
    %v1473 = vunpack.c.h.b16 %v399
    %v1474 = vunpack.c.l.b16 %v400
    %v1475 = vunpack.c.h.b16 %v400
    %v1476 = vunpack.c.l.b16 %v401
    %v1477 = vunpack.c.h.b16 %v401
    %v1478 = vunpack.c.l.b16 %v402
    %v1479 = vunpack.c.h.b16 %v402
    %v1480 = vunpack.c.l.b16 %v403
    %v1481 = vunpack.c.h.b16 %v403
    %v1482 = vunpack.c.l.b16 %v404
    %v1483 = vunpack.c.h.b16 %v404
    %v1484 = vunpack.c.l.b16 %v405
    %v1485 = vunpack.c.h.b16 %v405
    %v1486 = vunpack.c.l.b16 %v406
    %v1487 = vunpack.c.h.b16 %v406
    %v1488 = vunpack.c.l.b16 %v407
    %v1489 = vunpack.c.h.b16 %v407
    %v1490 = vunpack.c.l.b16 %v408
    %v1491 = vunpack.c.h.b16 %v408
    %v1492 = vunpack.c.l.b16 %v409
    %v1493 = vunpack.c.h.b16 %v409
    %v1494 = vunpack.c.l.b16 %v410
    %v1495 = vunpack.c.h.b16 %v410
    %v1496 = vunpack.c.l.b16 %v411
    %v1497 = vunpack.c.h.b16 %v411
    %v1498 = vunpack.c.l.b16 %v412
    %v1499 = vunpack.c.h.b16 %v412
    %v1500 = vunpack.c.l.b16 %v413
    %v1501 = vunpack.c.h.b16 %v413
    %v1502 = vunpack.c.l.b16 %v414
    %v1503 = vunpack.c.h.b16 %v414
    %v1504 = vunpack.c.l.b16 %v415
    %v1505 = vunpack.c.h.b16 %v415
    %v1506 = vunpack.c.l.b16 %v416
    %v1507 = vunpack.c.h.b16 %v416
    %v1508 = vunpack.c.l.b16 %v417
    %v1509 = vunpack.c.h.b16 %v417
    %v1510 = vunpack.c.l.b16 %v418
    %v1511 = vunpack.c.h.b16 %v418
    %v1512 = vunpack.c.l.b16 %v419
    %v1513 = vunpack.c.h.b16 %v419
    %v1514 = vunpack.c.l.b16 %v420
    %v1515 = vunpack.c.h.b16 %v420
    %v1516 = vunpack.c.l.b16 %v421
    %v1517 = vunpack.c.h.b16 %v421
    %v1518 = vunpack.c.l.b16 %v422
    %v1519 = vunpack.c.h.b16 %v422
    %v1520 = vunpack.c.l.b16 %v423
    %v1521 = vunpack.c.h.b16 %v423
    %v1522 = vunpack.c.l.b16 %v424
    %v1523 = vunpack.c.h.b16 %v424
    %v1524 = vunpack.c.l.b16 %v425
    %v1525 = vunpack.c.h.b16 %v425
    %v1526 = vunpack.c.l.b16 %v426
    %v1527 = vunpack.c.h.b16 %v426
    %v1528 = vunpack.c.l.b16 %v427
    %v1529 = vunpack.c.h.b16 %v427
    %v1530 = vunpack.c.l.b16 %v428
    %v1531 = vunpack.c.h.b16 %v428
    %v1532 = vunpack.c.l.b16 %v429
    %v1533 = vunpack.c.h.b16 %v429
    %v1534 = vunpack.c.l.b16 %v430
    %v1535 = vunpack.c.h.b16 %v430
    %v1536 = vunpack.c.l.b16 %v431
    %v1537 = vunpack.c.h.b16 %v431
    %v1538 = vunpack.c.l.b16 %v432
    %v1539 = vunpack.c.h.b16 %v432
    %v1540 = vunpack.c.l.b16 %v433
    %v1541 = vunpack.c.h.b16 %v433
    %v1542 = vunpack.c.l.b16 %v434
    %v1543 = vunpack.c.h.b16 %v434
    %v1544 = vunpack.c.l.b16 %v435
    %v1545 = vunpack.c.h.b16 %v435
    %v1546 = vunpack.c.l.b16 %v436
    %v1547 = vunpack.c.h.b16 %v436
    %v1548 = vunpack.c.l.b16 %v437
    %v1549 = vunpack.c.h.b16 %v437
    %v1550 = vunpack.c.l.b16 %v438
    %v1551 = vunpack.c.h.b16 %v438
    %v1552 = vunpack.c.l.b16 %v439
    %v1553 = vunpack.c.h.b16 %v439
    %v1554 = vunpack.c.l.b16 %v440
    %v1555 = vunpack.c.h.b16 %v440
    %v1556 = vunpack.c.l.b16 %v441
    %v1557 = vunpack.c.h.b16 %v441
    %v1558 = vunpack.c.l.b16 %v442
    %v1559 = vunpack.c.h.b16 %v442
    %v1560 = vunpack.c.l.b16 %v443
    %v1561 = vunpack.c.h.b16 %v443
    %v1562 = vunpack.c.l.b16 %v444
    %v1563 = vunpack.c.h.b16 %v444
    %v1564 = vunpack.c.l.b16 %v445
    %v1565 = vunpack.c.h.b16 %v445
    %v1566 = vunpack.c.l.b16 %v446
    %v1567 = vunpack.c.h.b16 %v446
    %v1568 = vunpack.c.l.b16 %v447
    %v1569 = vunpack.c.h.b16 %v447
    %v1570 = vunpack.c.l.b16 %v448
    %v1571 = vunpack.c.h.b16 %v448
    %v1572 = vunpack.c.l.b16 %v449
    %v1573 = vunpack.c.h.b16 %v449
    %v1574 = vunpack.c.l.b16 %v450
    %v1575 = vunpack.c.h.b16 %v450
    %v1576 = vunpack.c.l.b16 %v451
    %v1577 = vunpack.c.h.b16 %v451
    %v1578 = vunpack.c.l.b16 %v452
    %v1579 = vunpack.c.h.b16 %v452
    %v1580 = vunpack.c.l.b16 %v453
    %v1581 = vunpack.c.h.b16 %v453
    %v1582 = vunpack.c.l.b16 %v454
    %v1583 = vunpack.c.h.b16 %v454
    %v1584 = vunpack.c.l.b16 %v455
    %v1585 = vunpack.c.h.b16 %v455
    %v1586 = vunpack.c.l.b16 %v456
    %v1587 = vunpack.c.h.b16 %v456
    %v1588 = vunpack.c.l.b16 %v457
    %v1589 = vunpack.c.h.b16 %v457
    %v1590 = vunpack.c.l.b16 %v458
    %v1591 = vunpack.c.h.b16 %v458
    %v1592 = vunpack.c.l.b16 %v459
    %v1593 = vunpack.c.h.b16 %v459
    %v1594 = vunpack.c.l.b16 %v460
    %v1595 = vunpack.c.h.b16 %v460
    %v1596 = vunpack.c.l.b16 %v461
    %v1597 = vunpack.c.h.b16 %v461
    %v1598 = vunpack.c.l.b16 %v462
    %v1599 = vunpack.c.h.b16 %v462
    %v1600 = vunpack.c.l.b16 %v463
    %v1601 = vunpack.c.h.b16 %v463
    %v1602 = vunpack.c.l.b16 %v464
    %v1603 = vunpack.c.h.b16 %v464
    %v1604 = vunpack.c.l.b16 %v465
    %v1605 = vunpack.c.h.b16 %v465
    %v1606 = vunpack.c.l.b16 %v466
    %v1607 = vunpack.c.h.b16 %v466
    %v1608 = vunpack.c.l.b16 %v467
    %v1609 = vunpack.c.h.b16 %v467
    %v1610 = vunpack.c.l.b16 %v468
    %v1611 = vunpack.c.h.b16 %v468
    %v1612 = vunpack.c.l.b16 %v469
    %v1613 = vunpack.c.h.b16 %v469
    %v1614 = vunpack.c.l.b16 %v470
    %v1615 = vunpack.c.h.b16 %v470
    %v1616 = vunpack.c.l.b16 %v471
    %v1617 = vunpack.c.h.b16 %v471
    %v1618 = vunpack.c.l.b16 %v472
    %v1619 = vunpack.c.h.b16 %v472
    %v1620 = vunpack.c.l.b16 %v473
    %v1621 = vunpack.c.h.b16 %v473
    %v1622 = vunpack.c.l.b16 %v474
    %v1623 = vunpack.c.h.b16 %v474
    %v1624 = vunpack.c.l.b16 %v475
    %v1625 = vunpack.c.h.b16 %v475
    %v1626 = vunpack.c.l.b16 %v476
    %v1627 = vunpack.c.h.b16 %v476
    %v1628 = vunpack.c.l.b16 %v477
    %v1629 = vunpack.c.h.b16 %v477
    %v1630 = vunpack.c.l.b16 %v478
    %v1631 = vunpack.c.h.b16 %v478
    %v1632 = vunpack.c.l.b16 %v479
    %v1633 = vunpack.c.h.b16 %v479
    %v1634 = vunpack.c.l.b16 %v480
    %v1635 = vunpack.c.h.b16 %v480
    %v1636 = vunpack.c.l.b16 %v481
    %v1637 = vunpack.c.h.b16 %v481
    %v1638 = vunpack.c.l.b16 %v482
    %v1639 = vunpack.c.h.b16 %v482
    %v1640 = vunpack.c.l.b16 %v483
    %v1641 = vunpack.c.h.b16 %v483
    %v1642 = vunpack.c.l.b16 %v484
    %v1643 = vunpack.c.h.b16 %v484
    %v1644 = vunpack.c.l.b16 %v485
    %v1645 = vunpack.c.h.b16 %v485
    %v1646 = vunpack.c.l.b16 %v486
    %v1647 = vunpack.c.h.b16 %v486
    %v1648 = vunpack.c.l.b16 %v487
    %v1649 = vunpack.c.h.b16 %v487
    %v1650 = vpack.c.b16 %v886, %v882
    %v1651 = vpack.c.b16 %v887, %v883
    %v1652 = vpack.c.b16 %v888, %v884
    %v1653 = vpack.c.b16 %v889, %v885
    %v1654 = vpack.c.b16 %v894, %v890
    %v1655 = vpack.c.b16 %v895, %v891
    %v1656 = vpack.c.b16 %v896, %v892
    %v1657 = vpack.c.b16 %v897, %v893
    %v1658 = vpack.c.b16 %v902, %v898
    %v1659 = vpack.c.b16 %v903, %v899
    %v1660 = vpack.c.b16 %v904, %v900
    %v1661 = vpack.c.b16 %v905, %v901
    %v1662 = vpack.c.b16 %v910, %v906
    %v1663 = vpack.c.b16 %v911, %v907
    %v1664 = vpack.c.b16 %v912, %v908
    %v1665 = vpack.c.b16 %v913, %v909
    %v1666 = vpack.c.b16 %v918, %v914
    %v1667 = vpack.c.b16 %v919, %v915
    %v1668 = vpack.c.b16 %v920, %v916
    %v1669 = vpack.c.b16 %v921, %v917
    %v1670 = vpack.c.b16 %v926, %v922
    %v1671 = vpack.c.b16 %v927, %v923
    %v1672 = vpack.c.b16 %v928, %v924
    %v1673 = vpack.c.b16 %v929, %v925
    %v1674 = vpack.c.b16 %v934, %v930
    %v1675 = vpack.c.b16 %v935, %v931
    %v1676 = vpack.c.b16 %v936, %v932
    %v1677 = vpack.c.b16 %v937, %v933
    %v1678 = vpack.c.b16 %v942, %v938
    %v1679 = vpack.c.b16 %v943, %v939
    %v1680 = vpack.c.b16 %v944, %v940
    %v1681 = vpack.c.b16 %v945, %v941
    %v1682 = vpack.c.b16 %v950, %v946
    %v1683 = vpack.c.b16 %v951, %v947
    %v1684 = vpack.c.b16 %v952, %v948
    %v1685 = vpack.c.b16 %v953, %v949
    %v1686 = vpack.c.b16 %v958, %v954
    %v1687 = vpack.c.b16 %v959, %v955
    %v1688 = vpack.c.b16 %v960, %v956
    %v1689 = vpack.c.b16 %v961, %v957
    %v1690 = vpack.c.b16 %v966, %v962
    %v1691 = vpack.c.b16 %v967, %v963
    %v1692 = vpack.c.b16 %v968, %v964
    %v1693 = vpack.c.b16 %v969, %v965
    %v1694 = vpack.c.b16 %v974, %v970
    %v1695 = vpack.c.b16 %v975, %v971
    %v1696 = vpack.c.b16 %v976, %v972
    %v1697 = vpack.c.b16 %v977, %v973
    %v1698 = vpack.c.b16 %v982, %v978
    %v1699 = vpack.c.b16 %v983, %v979
    %v1700 = vpack.c.b16 %v984, %v980
    %v1701 = vpack.c.b16 %v985, %v981
    %v1702 = vpack.c.b16 %v990, %v986
    %v1703 = vpack.c.b16 %v991, %v987
    %v1704 = vpack.c.b16 %v992, %v988
    %v1705 = vpack.c.b16 %v993, %v989
    %v1706 = vpack.c.b16 %v998, %v994
    %v1707 = vpack.c.b16 %v999, %v995
    %v1708 = vpack.c.b16 %v1000, %v996
    %v1709 = vpack.c.b16 %v1001, %v997
    %v1710 = vpack.c.b16 %v1006, %v1002
    %v1711 = vpack.c.b16 %v1007, %v1003
    %v1712 = vpack.c.b16 %v1008, %v1004
    %v1713 = vpack.c.b16 %v1009, %v1005
    %v1714 = vpack.c.b16 %v1014, %v1010
    %v1715 = vpack.c.b16 %v1015, %v1011
    %v1716 = vpack.c.b16 %v1016, %v1012
    %v1717 = vpack.c.b16 %v1017, %v1013
    %v1718 = vpack.c.b16 %v1022, %v1018
    %v1719 = vpack.c.b16 %v1023, %v1019
    %v1720 = vpack.c.b16 %v1024, %v1020
    %v1721 = vpack.c.b16 %v1025, %v1021
    %v1722 = vpack.c.b16 %v1030, %v1026
    %v1723 = vpack.c.b16 %v1031, %v1027
    %v1724 = vpack.c.b16 %v1032, %v1028
    %v1725 = vpack.c.b16 %v1033, %v1029
    %v1726 = vpack.c.b16 %v1038, %v1034
    %v1727 = vpack.c.b16 %v1039, %v1035
    %v1728 = vpack.c.b16 %v1040, %v1036
    %v1729 = vpack.c.b16 %v1041, %v1037
    %v1730 = vpack.c.b16 %v1046, %v1042
    %v1731 = vpack.c.b16 %v1047, %v1043
    %v1732 = vpack.c.b16 %v1048, %v1044
    %v1733 = vpack.c.b16 %v1049, %v1045
    %v1734 = vpack.c.b16 %v1054, %v1050
    %v1735 = vpack.c.b16 %v1055, %v1051
    %v1736 = vpack.c.b16 %v1056, %v1052
    %v1737 = vpack.c.b16 %v1057, %v1053
    %v1738 = vpack.c.b16 %v1062, %v1058
    %v1739 = vpack.c.b16 %v1063, %v1059
    %v1740 = vpack.c.b16 %v1064, %v1060
    %v1741 = vpack.c.b16 %v1065, %v1061
    %v1742 = vpack.c.b16 %v1070, %v1066
    %v1743 = vpack.c.b16 %v1071, %v1067
    %v1744 = vpack.c.b16 %v1072, %v1068
    %v1745 = vpack.c.b16 %v1073, %v1069
    %v1746 = vpack.c.b16 %v1078, %v1074
    %v1747 = vpack.c.b16 %v1079, %v1075
    %v1748 = vpack.c.b16 %v1080, %v1076
    %v1749 = vpack.c.b16 %v1081, %v1077
    %v1750 = vpack.c.b16 %v1086, %v1082
    %v1751 = vpack.c.b16 %v1087, %v1083
    %v1752 = vpack.c.b16 %v1088, %v1084
    %v1753 = vpack.c.b16 %v1089, %v1085
    %v1754 = vpack.c.b16 %v1094, %v1090
    %v1755 = vpack.c.b16 %v1095, %v1091
    %v1756 = vpack.c.b16 %v1096, %v1092
    %v1757 = vpack.c.b16 %v1097, %v1093
    %v1758 = vpack.c.b16 %v1102, %v1098
    %v1759 = vpack.c.b16 %v1103, %v1099
    %v1760 = vpack.c.b16 %v1104, %v1100
    %v1761 = vpack.c.b16 %v1105, %v1101
    %v1762 = vpack.c.b16 %v1110, %v1106
    %v1763 = vpack.c.b16 %v1111, %v1107
    %v1764 = vpack.c.b16 %v1112, %v1108
    %v1765 = vpack.c.b16 %v1113, %v1109
    %v1766 = vpack.c.b16 %v1118, %v1114
    %v1767 = vpack.c.b16 %v1119, %v1115
    %v1768 = vpack.c.b16 %v1120, %v1116
    %v1769 = vpack.c.b16 %v1121, %v1117
    %v1770 = vpack.c.b16 %v1126, %v1122
    %v1771 = vpack.c.b16 %v1127, %v1123
    %v1772 = vpack.c.b16 %v1128, %v1124
    %v1773 = vpack.c.b16 %v1129, %v1125
    %v1774 = vpack.c.b16 %v1134, %v1130
    %v1775 = vpack.c.b16 %v1135, %v1131
    %v1776 = vpack.c.b16 %v1136, %v1132
    %v1777 = vpack.c.b16 %v1137, %v1133
    %v1778 = vpack.c.b16 %v1142, %v1138
    %v1779 = vpack.c.b16 %v1143, %v1139
    %v1780 = vpack.c.b16 %v1144, %v1140
    %v1781 = vpack.c.b16 %v1145, %v1141
    %v1782 = vpack.c.b16 %v1150, %v1146
    %v1783 = vpack.c.b16 %v1151, %v1147
    %v1784 = vpack.c.b16 %v1152, %v1148
    %v1785 = vpack.c.b16 %v1153, %v1149
    %v1786 = vpack.c.b16 %v1158, %v1154
    %v1787 = vpack.c.b16 %v1159, %v1155
    %v1788 = vpack.c.b16 %v1160, %v1156
    %v1789 = vpack.c.b16 %v1161, %v1157
    %v1790 = vpack.c.b16 %v1166, %v1162
    %v1791 = vpack.c.b16 %v1167, %v1163
    %v1792 = vpack.c.b16 %v1168, %v1164
    %v1793 = vpack.c.b16 %v1169, %v1165
    %v1794 = vpack.c.b16 %v1174, %v1170
    %v1795 = vpack.c.b16 %v1175, %v1171
    %v1796 = vpack.c.b16 %v1176, %v1172
    %v1797 = vpack.c.b16 %v1177, %v1173
    %v1798 = vpack.c.b16 %v1182, %v1178
    %v1799 = vpack.c.b16 %v1183, %v1179
    %v1800 = vpack.c.b16 %v1184, %v1180
    %v1801 = vpack.c.b16 %v1185, %v1181
    %v1802 = vpack.c.b16 %v1190, %v1186
    %v1803 = vpack.c.b16 %v1191, %v1187
    %v1804 = vpack.c.b16 %v1192, %v1188
    %v1805 = vpack.c.b16 %v1193, %v1189
    %v1806 = vpack.c.b16 %v1198, %v1194
    %v1807 = vpack.c.b16 %v1199, %v1195
    %v1808 = vpack.c.b16 %v1200, %v1196
    %v1809 = vpack.c.b16 %v1201, %v1197
    %v1810 = vpack.c.b16 %v1206, %v1202
    %v1811 = vpack.c.b16 %v1207, %v1203
    %v1812 = vpack.c.b16 %v1208, %v1204
    %v1813 = vpack.c.b16 %v1209, %v1205
    %v1814 = vpack.c.b16 %v1214, %v1210
    %v1815 = vpack.c.b16 %v1215, %v1211
    %v1816 = vpack.c.b16 %v1216, %v1212
    %v1817 = vpack.c.b16 %v1217, %v1213
    %v1818 = vpack.c.b16 %v1222, %v1218
    %v1819 = vpack.c.b16 %v1223, %v1219
    %v1820 = vpack.c.b16 %v1224, %v1220
    %v1821 = vpack.c.b16 %v1225, %v1221
    %v1822 = vpack.c.b16 %v1230, %v1226
    %v1823 = vpack.c.b16 %v1231, %v1227
    %v1824 = vpack.c.b16 %v1232, %v1228
    %v1825 = vpack.c.b16 %v1233, %v1229
    %v1826 = vpack.c.b16 %v1238, %v1234
    %v1827 = vpack.c.b16 %v1239, %v1235
    %v1828 = vpack.c.b16 %v1240, %v1236
    %v1829 = vpack.c.b16 %v1241, %v1237
    %v1830 = vpack.c.b16 %v1246, %v1242
    %v1831 = vpack.c.b16 %v1247, %v1243
    %v1832 = vpack.c.b16 %v1248, %v1244
    %v1833 = vpack.c.b16 %v1249, %v1245
    %v1834 = vpack.c.b16 %v1254, %v1250
    %v1835 = vpack.c.b16 %v1255, %v1251
    %v1836 = vpack.c.b16 %v1256, %v1252
    %v1837 = vpack.c.b16 %v1257, %v1253
    %v1838 = vpack.c.b16 %v1262, %v1258
    %v1839 = vpack.c.b16 %v1263, %v1259
    %v1840 = vpack.c.b16 %v1264, %v1260
    %v1841 = vpack.c.b16 %v1265, %v1261
    %v1842 = vpack.c.b16 %v1270, %v1266
    %v1843 = vpack.c.b16 %v1271, %v1267
    %v1844 = vpack.c.b16 %v1272, %v1268
    %v1845 = vpack.c.b16 %v1273, %v1269
    %v1846 = vpack.c.b16 %v1278, %v1274
    %v1847 = vpack.c.b16 %v1279, %v1275
    %v1848 = vpack.c.b16 %v1280, %v1276
    %v1849 = vpack.c.b16 %v1281, %v1277
    %v1850 = vpack.c.b16 %v1286, %v1282
    %v1851 = vpack.c.b16 %v1287, %v1283
    %v1852 = vpack.c.b16 %v1288, %v1284
    %v1853 = vpack.c.b16 %v1289, %v1285
    %v1854 = vpack.c.b16 %v1294, %v1290
    %v1855 = vpack.c.b16 %v1295, %v1291
    %v1856 = vpack.c.b16 %v1296, %v1292
    %v1857 = vpack.c.b16 %v1297, %v1293
    %v1858 = vpack.c.b16 %v1302, %v1298
    %v1859 = vpack.c.b16 %v1303, %v1299
    %v1860 = vpack.c.b16 %v1304, %v1300
    %v1861 = vpack.c.b16 %v1305, %v1301
    %v1862 = vpack.c.b16 %v1310, %v1306
    %v1863 = vpack.c.b16 %v1311, %v1307
    %v1864 = vpack.c.b16 %v1312, %v1308
    %v1865 = vpack.c.b16 %v1313, %v1309
    %v1866 = vpack.c.b16 %v1318, %v1314
    %v1867 = vpack.c.b16 %v1319, %v1315
    %v1868 = vpack.c.b16 %v1320, %v1316
    %v1869 = vpack.c.b16 %v1321, %v1317
    %v1870 = vpack.c.b16 %v1326, %v1322
    %v1871 = vpack.c.b16 %v1327, %v1323
    %v1872 = vpack.c.b16 %v1328, %v1324
    %v1873 = vpack.c.b16 %v1329, %v1325
    %v1874 = vpack.c.b16 %v1334, %v1330
    %v1875 = vpack.c.b16 %v1335, %v1331
    %v1876 = vpack.c.b16 %v1336, %v1332
    %v1877 = vpack.c.b16 %v1337, %v1333
    %v1878 = vpack.c.b16 %v1342, %v1338
    %v1879 = vpack.c.b16 %v1343, %v1339
    %v1880 = vpack.c.b16 %v1344, %v1340
    %v1881 = vpack.c.b16 %v1345, %v1341
    %v1882 = vpack.c.b16 %v1350, %v1346
    %v1883 = vpack.c.b16 %v1351, %v1347
    %v1884 = vpack.c.b16 %v1352, %v1348
    %v1885 = vpack.c.b16 %v1353, %v1349
    %v1886 = vpack.c.b16 %v1358, %v1354
    %v1887 = vpack.c.b16 %v1359, %v1355
    %v1888 = vpack.c.b16 %v1360, %v1356
    %v1889 = vpack.c.b16 %v1361, %v1357
    %v1890 = vpack.c.b16 %v1366, %v1362
    %v1891 = vpack.c.b16 %v1367, %v1363
    %v1892 = vpack.c.b16 %v1368, %v1364
    %v1893 = vpack.c.b16 %v1369, %v1365
    %v1894 = vpack.c.b16 %v1374, %v1370
    %v1895 = vpack.c.b16 %v1375, %v1371
    %v1896 = vpack.c.b16 %v1376, %v1372
    %v1897 = vpack.c.b16 %v1377, %v1373
    %v1898 = vpack.c.b16 %v1382, %v1378
    %v1899 = vpack.c.b16 %v1383, %v1379
    %v1900 = vpack.c.b16 %v1384, %v1380
    %v1901 = vpack.c.b16 %v1385, %v1381
    %v1902 = vpack.c.b16 %v1390, %v1386
    %v1903 = vpack.c.b16 %v1391, %v1387
    %v1904 = vpack.c.b16 %v1392, %v1388
    %v1905 = vpack.c.b16 %v1393, %v1389
    %v1906 = vpack.c.b16 %v1398, %v1394
    %v1907 = vpack.c.b16 %v1399, %v1395
    %v1908 = vpack.c.b16 %v1400, %v1396
    %v1909 = vpack.c.b16 %v1401, %v1397
    %v1910 = vpack.c.b16 %v1406, %v1402
    %v1911 = vpack.c.b16 %v1407, %v1403
    %v1912 = vpack.c.b16 %v1408, %v1404
    %v1913 = vpack.c.b16 %v1409, %v1405
    %v1914 = vpack.c.b16 %v1414, %v1410
    %v1915 = vpack.c.b16 %v1415, %v1411
    %v1916 = vpack.c.b16 %v1416, %v1412
    %v1917 = vpack.c.b16 %v1417, %v1413
    %v1918 = vpack.c.b16 %v1422, %v1418
    %v1919 = vpack.c.b16 %v1423, %v1419
    %v1920 = vpack.c.b16 %v1424, %v1420
    %v1921 = vpack.c.b16 %v1425, %v1421
    %v1922 = vpack.c.b16 %v1430, %v1426
    %v1923 = vpack.c.b16 %v1431, %v1427
    %v1924 = vpack.c.b16 %v1432, %v1428
    %v1925 = vpack.c.b16 %v1433, %v1429
    %v1926 = vpack.c.b16 %v1438, %v1434
    %v1927 = vpack.c.b16 %v1439, %v1435
    %v1928 = vpack.c.b16 %v1440, %v1436
    %v1929 = vpack.c.b16 %v1441, %v1437
    %v1930 = vpack.c.b16 %v1446, %v1442
    %v1931 = vpack.c.b16 %v1447, %v1443
    %v1932 = vpack.c.b16 %v1448, %v1444
    %v1933 = vpack.c.b16 %v1449, %v1445
    %v1934 = vpack.c.b16 %v1454, %v1450
    %v1935 = vpack.c.b16 %v1455, %v1451
    %v1936 = vpack.c.b16 %v1456, %v1452
    %v1937 = vpack.c.b16 %v1457, %v1453
    %v1938 = vpack.c.b16 %v1462, %v1458
    %v1939 = vpack.c.b16 %v1463, %v1459
    %v1940 = vpack.c.b16 %v1464, %v1460
    %v1941 = vpack.c.b16 %v1465, %v1461
    %v1942 = vpack.c.b16 %v1470, %v1466
    %v1943 = vpack.c.b16 %v1471, %v1467
    %v1944 = vpack.c.b16 %v1472, %v1468
    %v1945 = vpack.c.b16 %v1473, %v1469
    %v1946 = vpack.c.b16 %v1478, %v1474
    %v1947 = vpack.c.b16 %v1479, %v1475
    %v1948 = vpack.c.b16 %v1480, %v1476
    %v1949 = vpack.c.b16 %v1481, %v1477
    %v1950 = vpack.c.b16 %v1486, %v1482
    %v1951 = vpack.c.b16 %v1487, %v1483
    %v1952 = vpack.c.b16 %v1488, %v1484
    %v1953 = vpack.c.b16 %v1489, %v1485
    %v1954 = vpack.c.b16 %v1494, %v1490
    %v1955 = vpack.c.b16 %v1495, %v1491
    %v1956 = vpack.c.b16 %v1496, %v1492
    %v1957 = vpack.c.b16 %v1497, %v1493
    %v1958 = vpack.c.b16 %v1502, %v1498
    %v1959 = vpack.c.b16 %v1503, %v1499
    %v1960 = vpack.c.b16 %v1504, %v1500
    %v1961 = vpack.c.b16 %v1505, %v1501
    %v1962 = vpack.c.b16 %v1510, %v1506
    %v1963 = vpack.c.b16 %v1511, %v1507
    %v1964 = vpack.c.b16 %v1512, %v1508
    %v1965 = vpack.c.b16 %v1513, %v1509
    %v1966 = vpack.c.b16 %v1518, %v1514
    %v1967 = vpack.c.b16 %v1519, %v1515
    %v1968 = vpack.c.b16 %v1520, %v1516
    %v1969 = vpack.c.b16 %v1521, %v1517
    %v1970 = vpack.c.b16 %v1526, %v1522
    %v1971 = vpack.c.b16 %v1527, %v1523
    %v1972 = vpack.c.b16 %v1528, %v1524
    %v1973 = vpack.c.b16 %v1529, %v1525
    %v1974 = vpack.c.b16 %v1534, %v1530
    %v1975 = vpack.c.b16 %v1535, %v1531
    %v1976 = vpack.c.b16 %v1536, %v1532
    %v1977 = vpack.c.b16 %v1537, %v1533
    %v1978 = vpack.c.b16 %v1542, %v1538
    %v1979 = vpack.c.b16 %v1543, %v1539
    %v1980 = vpack.c.b16 %v1544, %v1540
    %v1981 = vpack.c.b16 %v1545, %v1541
    %v1982 = vpack.c.b16 %v1550, %v1546
    %v1983 = vpack.c.b16 %v1551, %v1547
    %v1984 = vpack.c.b16 %v1552, %v1548
    %v1985 = vpack.c.b16 %v1553, %v1549
    %v1986 = vpack.c.b16 %v1558, %v1554
    %v1987 = vpack.c.b16 %v1559, %v1555
    %v1988 = vpack.c.b16 %v1560, %v1556
    %v1989 = vpack.c.b16 %v1561, %v1557
    %v1990 = vpack.c.b16 %v1566, %v1562
    %v1991 = vpack.c.b16 %v1567, %v1563
    %v1992 = vpack.c.b16 %v1568, %v1564
    %v1993 = vpack.c.b16 %v1569, %v1565
    %v1994 = vpack.c.b16 %v1574, %v1570
    %v1995 = vpack.c.b16 %v1575, %v1571
    %v1996 = vpack.c.b16 %v1576, %v1572
    %v1997 = vpack.c.b16 %v1577, %v1573
    %v1998 = vpack.c.b16 %v1582, %v1578
    %v1999 = vpack.c.b16 %v1583, %v1579
    %v2000 = vpack.c.b16 %v1584, %v1580
    %v2001 = vpack.c.b16 %v1585, %v1581
    %v2002 = vpack.c.b16 %v1590, %v1586
    %v2003 = vpack.c.b16 %v1591, %v1587
    %v2004 = vpack.c.b16 %v1592, %v1588
    %v2005 = vpack.c.b16 %v1593, %v1589
    %v2006 = vpack.c.b16 %v1598, %v1594
    %v2007 = vpack.c.b16 %v1599, %v1595
    %v2008 = vpack.c.b16 %v1600, %v1596
    %v2009 = vpack.c.b16 %v1601, %v1597
    %v2010 = vpack.c.b16 %v1606, %v1602
    %v2011 = vpack.c.b16 %v1607, %v1603
    %v2012 = vpack.c.b16 %v1608, %v1604
    %v2013 = vpack.c.b16 %v1609, %v1605
    %v2014 = vpack.c.b16 %v1614, %v1610
    %v2015 = vpack.c.b16 %v1615, %v1611
    %v2016 = vpack.c.b16 %v1616, %v1612
    %v2017 = vpack.c.b16 %v1617, %v1613
    %v2018 = vpack.c.b16 %v1622, %v1618
    %v2019 = vpack.c.b16 %v1623, %v1619
    %v2020 = vpack.c.b16 %v1624, %v1620
    %v2021 = vpack.c.b16 %v1625, %v1621
    %v2022 = vpack.c.b16 %v1630, %v1626
    %v2023 = vpack.c.b16 %v1631, %v1627
    %v2024 = vpack.c.b16 %v1632, %v1628
    %v2025 = vpack.c.b16 %v1633, %v1629
    %v2026 = vpack.c.b16 %v1638, %v1634
    %v2027 = vpack.c.b16 %v1639, %v1635
    %v2028 = vpack.c.b16 %v1640, %v1636
    %v2029 = vpack.c.b16 %v1641, %v1637
    %v2030 = vpack.c.b16 %v1646, %v1642
    %v2031 = vpack.c.b16 %v1647, %v1643
    %v2032 = vpack.c.b16 %v1648, %v1644
    %v2033 = vpack.c.b16 %v1649, %v1645
    %2418 = vmatpush.bf16.msra.mxu0 %v1678
    %2419 = vmatpush.bf16.msra.mxu0 %v1674
    %2420 = vmatpush.bf16.msra.mxu0 %v1670
    %2421 = vmatpush.bf16.msra.mxu0 %v1666
    %2422 = vmatpush.bf16.msra.mxu0 %v1662
    %2423 = vmatpush.bf16.msra.mxu0 %v1658
    %2424 = vmatpush.bf16.msra.mxu0 %v1654
    %2425 = vmatpush.bf16.msra.mxu0 %v1650
    %2426 = vmatmul.bf16.gmra.mxu0 %v92
    %v2427 = vpop.f32.mrf.mxu0
    %v2428 = vadd.f32 %v490, %v2427
    %v2429 = vpop.f32.mrf.mxu0
    %2430 = vdwg.mxu0
    %2431 = vmatpush.bf16.msra.mxu0 %v1710
    %2432 = vmatpush.bf16.msra.mxu0 %v1706
    %2433 = vmatpush.bf16.msra.mxu0 %v1702
    %2434 = vmatpush.bf16.msra.mxu0 %v1698
    %2435 = vmatpush.bf16.msra.mxu0 %v1694
    %2436 = vmatpush.bf16.msra.mxu0 %v1690
    %2437 = vmatpush.bf16.msra.mxu0 %v1686
    %2438 = vmatpush.bf16.msra.mxu0 %v1682
    %2439 = vmatmul.bf16.gmra.mxu0 %v93
    %v2440 = vpop.f32.mrf.mxu0
    %v2441 = vadd.f32 %v2428, %v2440
    %v2442 = vpop.f32.mrf.mxu0
    %2443 = vdwg.mxu0
    %2444 = vmatpush.bf16.msra.mxu0 %v1742
    %2445 = vmatpush.bf16.msra.mxu0 %v1738
    %2446 = vmatpush.bf16.msra.mxu0 %v1734
    %2447 = vmatpush.bf16.msra.mxu0 %v1730
    %2448 = vmatpush.bf16.msra.mxu0 %v1726
    %2449 = vmatpush.bf16.msra.mxu0 %v1722
    %2450 = vmatpush.bf16.msra.mxu0 %v1718
    %2451 = vmatpush.bf16.msra.mxu0 %v1714
    %2452 = vmatmul.bf16.gmra.mxu0 %v94
    %v2453 = vpop.f32.mrf.mxu0
    %v2454 = vadd.f32 %v2441, %v2453
    %v2455 = vpop.f32.mrf.mxu0
    %2456 = vdwg.mxu0
    %2457 = vmatpush.bf16.msra.mxu0 %v1774
    %2458 = vmatpush.bf16.msra.mxu0 %v1770
    %2459 = vmatpush.bf16.msra.mxu0 %v1766
    %2460 = vmatpush.bf16.msra.mxu0 %v1762
    %2461 = vmatpush.bf16.msra.mxu0 %v1758
    %2462 = vmatpush.bf16.msra.mxu0 %v1754
    %2463 = vmatpush.bf16.msra.mxu0 %v1750
    %2464 = vmatpush.bf16.msra.mxu0 %v1746
    %2465 = vmatmul.bf16.gmra.mxu0 %v95
    %v2466 = vpop.f32.mrf.mxu0
    %v2467 = vadd.f32 %v2454, %v2466
    %v2468 = vpop.f32.mrf.mxu0
    %2469 = vdwg.mxu0
    %2470 = vmatpush.bf16.msra.mxu0 %v1806
    %2471 = vmatpush.bf16.msra.mxu0 %v1802
    %2472 = vmatpush.bf16.msra.mxu0 %v1798
    %2473 = vmatpush.bf16.msra.mxu0 %v1794
    %2474 = vmatpush.bf16.msra.mxu0 %v1790
    %2475 = vmatpush.bf16.msra.mxu0 %v1786
    %2476 = vmatpush.bf16.msra.mxu0 %v1782
    %2477 = vmatpush.bf16.msra.mxu0 %v1778
    %2478 = vmatmul.bf16.gmra.mxu0 %v96
    %v2479 = vpop.f32.mrf.mxu0
    %v2480 = vadd.f32 %v2467, %v2479
    %v2481 = vpop.f32.mrf.mxu0
    %2482 = vdwg.mxu0
    %2483 = vmatpush.bf16.msra.mxu0 %v1838
    %2484 = vmatpush.bf16.msra.mxu0 %v1834
    %2485 = vmatpush.bf16.msra.mxu0 %v1830
    %2486 = vmatpush.bf16.msra.mxu0 %v1826
    %2487 = vmatpush.bf16.msra.mxu0 %v1822
    %2488 = vmatpush.bf16.msra.mxu0 %v1818
    %2489 = vmatpush.bf16.msra.mxu0 %v1814
    %2490 = vmatpush.bf16.msra.mxu0 %v1810
    %2491 = vmatmul.bf16.gmra.mxu0 %v97
    %v2492 = vpop.f32.mrf.mxu0
    %v2493 = vadd.f32 %v2480, %v2492
    %v2494 = vpop.f32.mrf.mxu0
    %2495 = vdwg.mxu0
    %2496 = vmatpush.bf16.msra.mxu0 %v1870
    %2497 = vmatpush.bf16.msra.mxu0 %v1866
    %2498 = vmatpush.bf16.msra.mxu0 %v1862
    %2499 = vmatpush.bf16.msra.mxu0 %v1858
    %2500 = vmatpush.bf16.msra.mxu0 %v1854
    %2501 = vmatpush.bf16.msra.mxu0 %v1850
    %2502 = vmatpush.bf16.msra.mxu0 %v1846
    %2503 = vmatpush.bf16.msra.mxu0 %v1842
    %2504 = vmatmul.bf16.gmra.mxu0 %v98
    %v2505 = vpop.f32.mrf.mxu0
    %v2506 = vadd.f32 %v2493, %v2505
    %v2507 = vpop.f32.mrf.mxu0
    %2508 = vdwg.mxu0
    %2509 = vmatpush.bf16.msra.mxu0 %v1902
    %2510 = vmatpush.bf16.msra.mxu0 %v1898
    %2511 = vmatpush.bf16.msra.mxu0 %v1894
    %2512 = vmatpush.bf16.msra.mxu0 %v1890
    %2513 = vmatpush.bf16.msra.mxu0 %v1886
    %2514 = vmatpush.bf16.msra.mxu0 %v1882
    %2515 = vmatpush.bf16.msra.mxu0 %v1878
    %2516 = vmatpush.bf16.msra.mxu0 %v1874
    %2517 = vmatmul.bf16.gmra.mxu0 %v99
    %v2518 = vpop.f32.mrf.mxu0
    %v2519 = vadd.f32 %v2506, %v2518
    %v2520 = vpop.f32.mrf.mxu0
    %2521 = vdwg.mxu0
    %2522 = vmatpush.bf16.msra.mxu0 %v1934
    %2523 = vmatpush.bf16.msra.mxu0 %v1930
    %2524 = vmatpush.bf16.msra.mxu0 %v1926
    %2525 = vmatpush.bf16.msra.mxu0 %v1922
    %2526 = vmatpush.bf16.msra.mxu0 %v1918
    %2527 = vmatpush.bf16.msra.mxu0 %v1914
    %2528 = vmatpush.bf16.msra.mxu0 %v1910
    %2529 = vmatpush.bf16.msra.mxu0 %v1906
    %2530 = vmatmul.bf16.gmra.mxu0 %v100
    %v2531 = vpop.f32.mrf.mxu0
    %v2532 = vadd.f32 %v2519, %v2531
    %v2533 = vpop.f32.mrf.mxu0
    %2534 = vdwg.mxu0
    %2535 = vmatpush.bf16.msra.mxu0 %v1966
    %2536 = vmatpush.bf16.msra.mxu0 %v1962
    %2537 = vmatpush.bf16.msra.mxu0 %v1958
    %2538 = vmatpush.bf16.msra.mxu0 %v1954
    %2539 = vmatpush.bf16.msra.mxu0 %v1950
    %2540 = vmatpush.bf16.msra.mxu0 %v1946
    %2541 = vmatpush.bf16.msra.mxu0 %v1942
    %2542 = vmatpush.bf16.msra.mxu0 %v1938
    %2543 = vmatmul.bf16.gmra.mxu0 %v101
    %v2544 = vpop.f32.mrf.mxu0
    %v2545 = vadd.f32 %v2532, %v2544
    %v2546 = vpop.f32.mrf.mxu0
    %2547 = vdwg.mxu0
    %2548 = vmatpush.bf16.msra.mxu0 %v1998
    %2549 = vmatpush.bf16.msra.mxu0 %v1994
    %2550 = vmatpush.bf16.msra.mxu0 %v1990
    %2551 = vmatpush.bf16.msra.mxu0 %v1986
    %2552 = vmatpush.bf16.msra.mxu0 %v1982
    %2553 = vmatpush.bf16.msra.mxu0 %v1978
    %2554 = vmatpush.bf16.msra.mxu0 %v1974
    %2555 = vmatpush.bf16.msra.mxu0 %v1970
    %2556 = vmatmul.bf16.gmra.mxu0 %v102
    %v2557 = vpop.f32.mrf.mxu0
    %v2558 = vadd.f32 %v2545, %v2557
    %v2559 = vpop.f32.mrf.mxu0
    %2560 = vdwg.mxu0
    %2561 = vmatpush.bf16.msra.mxu0 %v2030
    %2562 = vmatpush.bf16.msra.mxu0 %v2026
    %2563 = vmatpush.bf16.msra.mxu0 %v2022
    %2564 = vmatpush.bf16.msra.mxu0 %v2018
    %2565 = vmatpush.bf16.msra.mxu0 %v2014
    %2566 = vmatpush.bf16.msra.mxu0 %v2010
    %2567 = vmatpush.bf16.msra.mxu0 %v2006
    %2568 = vmatpush.bf16.msra.mxu0 %v2002
    %2569 = vmatmul.bf16.gmra.mxu0 %v103
    %v2570 = vpop.f32.mrf.mxu0
    %v2571 = vadd.f32 %v2558, %v2570
    %v2572 = vpop.f32.mrf.mxu0
    %2573 = vdwg.mxu0
    %2574 = vmatpush.bf16.msra.mxu0 %v1679
    %2575 = vmatpush.bf16.msra.mxu0 %v1675
    %2576 = vmatpush.bf16.msra.mxu0 %v1671
    %2577 = vmatpush.bf16.msra.mxu0 %v1667
    %2578 = vmatpush.bf16.msra.mxu0 %v1663
    %2579 = vmatpush.bf16.msra.mxu0 %v1659
    %2580 = vmatpush.bf16.msra.mxu0 %v1655
    %2581 = vmatpush.bf16.msra.mxu0 %v1651
    %2582 = vmatmul.bf16.gmra.mxu0 %v92
    %v2583 = vpop.f32.mrf.mxu0
    %v2584 = vadd.f32 %v491, %v2583
    %v2585 = vpop.f32.mrf.mxu0
    %2586 = vdwg.mxu0
    %2587 = vmatpush.bf16.msra.mxu0 %v1711
    %2588 = vmatpush.bf16.msra.mxu0 %v1707
    %2589 = vmatpush.bf16.msra.mxu0 %v1703
    %2590 = vmatpush.bf16.msra.mxu0 %v1699
    %2591 = vmatpush.bf16.msra.mxu0 %v1695
    %2592 = vmatpush.bf16.msra.mxu0 %v1691
    %2593 = vmatpush.bf16.msra.mxu0 %v1687
    %2594 = vmatpush.bf16.msra.mxu0 %v1683
    %2595 = vmatmul.bf16.gmra.mxu0 %v93
    %v2596 = vpop.f32.mrf.mxu0
    %v2597 = vadd.f32 %v2584, %v2596
    %v2598 = vpop.f32.mrf.mxu0
    %2599 = vdwg.mxu0
    %2600 = vmatpush.bf16.msra.mxu0 %v1743
    %2601 = vmatpush.bf16.msra.mxu0 %v1739
    %2602 = vmatpush.bf16.msra.mxu0 %v1735
    %2603 = vmatpush.bf16.msra.mxu0 %v1731
    %2604 = vmatpush.bf16.msra.mxu0 %v1727
    %2605 = vmatpush.bf16.msra.mxu0 %v1723
    %2606 = vmatpush.bf16.msra.mxu0 %v1719
    %2607 = vmatpush.bf16.msra.mxu0 %v1715
    %2608 = vmatmul.bf16.gmra.mxu0 %v94
    %v2609 = vpop.f32.mrf.mxu0
    %v2610 = vadd.f32 %v2597, %v2609
    %v2611 = vpop.f32.mrf.mxu0
    %2612 = vdwg.mxu0
    %2613 = vmatpush.bf16.msra.mxu0 %v1775
    %2614 = vmatpush.bf16.msra.mxu0 %v1771
    %2615 = vmatpush.bf16.msra.mxu0 %v1767
    %2616 = vmatpush.bf16.msra.mxu0 %v1763
    %2617 = vmatpush.bf16.msra.mxu0 %v1759
    %2618 = vmatpush.bf16.msra.mxu0 %v1755
    %2619 = vmatpush.bf16.msra.mxu0 %v1751
    %2620 = vmatpush.bf16.msra.mxu0 %v1747
    %2621 = vmatmul.bf16.gmra.mxu0 %v95
    %v2622 = vpop.f32.mrf.mxu0
    %v2623 = vadd.f32 %v2610, %v2622
    %v2624 = vpop.f32.mrf.mxu0
    %2625 = vdwg.mxu0
    %2626 = vmatpush.bf16.msra.mxu0 %v1807
    %2627 = vmatpush.bf16.msra.mxu0 %v1803
    %2628 = vmatpush.bf16.msra.mxu0 %v1799
    %2629 = vmatpush.bf16.msra.mxu0 %v1795
    %2630 = vmatpush.bf16.msra.mxu0 %v1791
    %2631 = vmatpush.bf16.msra.mxu0 %v1787
    %2632 = vmatpush.bf16.msra.mxu0 %v1783
    %2633 = vmatpush.bf16.msra.mxu0 %v1779
    %2634 = vmatmul.bf16.gmra.mxu0 %v96
    %v2635 = vpop.f32.mrf.mxu0
    %v2636 = vadd.f32 %v2623, %v2635
    %v2637 = vpop.f32.mrf.mxu0
    %2638 = vdwg.mxu0
    %2639 = vmatpush.bf16.msra.mxu0 %v1839
    %2640 = vmatpush.bf16.msra.mxu0 %v1835
    %2641 = vmatpush.bf16.msra.mxu0 %v1831
    %2642 = vmatpush.bf16.msra.mxu0 %v1827
    %2643 = vmatpush.bf16.msra.mxu0 %v1823
    %2644 = vmatpush.bf16.msra.mxu0 %v1819
    %2645 = vmatpush.bf16.msra.mxu0 %v1815
    %2646 = vmatpush.bf16.msra.mxu0 %v1811
    %2647 = vmatmul.bf16.gmra.mxu0 %v97
    %v2648 = vpop.f32.mrf.mxu0
    %v2649 = vadd.f32 %v2636, %v2648
    %v2650 = vpop.f32.mrf.mxu0
    %2651 = vdwg.mxu0
    %2652 = vmatpush.bf16.msra.mxu0 %v1871
    %2653 = vmatpush.bf16.msra.mxu0 %v1867
    %2654 = vmatpush.bf16.msra.mxu0 %v1863
    %2655 = vmatpush.bf16.msra.mxu0 %v1859
    %2656 = vmatpush.bf16.msra.mxu0 %v1855
    %2657 = vmatpush.bf16.msra.mxu0 %v1851
    %2658 = vmatpush.bf16.msra.mxu0 %v1847
    %2659 = vmatpush.bf16.msra.mxu0 %v1843
    %2660 = vmatmul.bf16.gmra.mxu0 %v98
    %v2661 = vpop.f32.mrf.mxu0
    %v2662 = vadd.f32 %v2649, %v2661
    %v2663 = vpop.f32.mrf.mxu0
    %2664 = vdwg.mxu0
    %2665 = vmatpush.bf16.msra.mxu0 %v1903
    %2666 = vmatpush.bf16.msra.mxu0 %v1899
    %2667 = vmatpush.bf16.msra.mxu0 %v1895
    %2668 = vmatpush.bf16.msra.mxu0 %v1891
    %2669 = vmatpush.bf16.msra.mxu0 %v1887
    %2670 = vmatpush.bf16.msra.mxu0 %v1883
    %2671 = vmatpush.bf16.msra.mxu0 %v1879
    %2672 = vmatpush.bf16.msra.mxu0 %v1875
    %2673 = vmatmul.bf16.gmra.mxu0 %v99
    %v2674 = vpop.f32.mrf.mxu0
    %v2675 = vadd.f32 %v2662, %v2674
    %v2676 = vpop.f32.mrf.mxu0
    %2677 = vdwg.mxu0
    %2678 = vmatpush.bf16.msra.mxu0 %v1935
    %2679 = vmatpush.bf16.msra.mxu0 %v1931
    %2680 = vmatpush.bf16.msra.mxu0 %v1927
    %2681 = vmatpush.bf16.msra.mxu0 %v1923
    %2682 = vmatpush.bf16.msra.mxu0 %v1919
    %2683 = vmatpush.bf16.msra.mxu0 %v1915
    %2684 = vmatpush.bf16.msra.mxu0 %v1911
    %2685 = vmatpush.bf16.msra.mxu0 %v1907
    %2686 = vmatmul.bf16.gmra.mxu0 %v100
    %v2687 = vpop.f32.mrf.mxu0
    %v2688 = vadd.f32 %v2675, %v2687
    %v2689 = vpop.f32.mrf.mxu0
    %2690 = vdwg.mxu0
    %2691 = vmatpush.bf16.msra.mxu0 %v1967
    %2692 = vmatpush.bf16.msra.mxu0 %v1963
    %2693 = vmatpush.bf16.msra.mxu0 %v1959
    %2694 = vmatpush.bf16.msra.mxu0 %v1955
    %2695 = vmatpush.bf16.msra.mxu0 %v1951
    %2696 = vmatpush.bf16.msra.mxu0 %v1947
    %2697 = vmatpush.bf16.msra.mxu0 %v1943
    %2698 = vmatpush.bf16.msra.mxu0 %v1939
    %2699 = vmatmul.bf16.gmra.mxu0 %v101
    %v2700 = vpop.f32.mrf.mxu0
    %v2701 = vadd.f32 %v2688, %v2700
    %v2702 = vpop.f32.mrf.mxu0
    %2703 = vdwg.mxu0
    %2704 = vmatpush.bf16.msra.mxu0 %v1999
    %2705 = vmatpush.bf16.msra.mxu0 %v1995
    %2706 = vmatpush.bf16.msra.mxu0 %v1991
    %2707 = vmatpush.bf16.msra.mxu0 %v1987
    %2708 = vmatpush.bf16.msra.mxu0 %v1983
    %2709 = vmatpush.bf16.msra.mxu0 %v1979
    %2710 = vmatpush.bf16.msra.mxu0 %v1975
    %2711 = vmatpush.bf16.msra.mxu0 %v1971
    %2712 = vmatmul.bf16.gmra.mxu0 %v102
    %v2713 = vpop.f32.mrf.mxu0
    %v2714 = vadd.f32 %v2701, %v2713
    %v2715 = vpop.f32.mrf.mxu0
    %2716 = vdwg.mxu0
    %2717 = vmatpush.bf16.msra.mxu0 %v2031
    %2718 = vmatpush.bf16.msra.mxu0 %v2027
    %2719 = vmatpush.bf16.msra.mxu0 %v2023
    %2720 = vmatpush.bf16.msra.mxu0 %v2019
    %2721 = vmatpush.bf16.msra.mxu0 %v2015
    %2722 = vmatpush.bf16.msra.mxu0 %v2011
    %2723 = vmatpush.bf16.msra.mxu0 %v2007
    %2724 = vmatpush.bf16.msra.mxu0 %v2003
    %2725 = vmatmul.bf16.gmra.mxu0 %v103
    %v2726 = vpop.f32.mrf.mxu0
    %v2727 = vadd.f32 %v2714, %v2726
    %v2728 = vpop.f32.mrf.mxu0
    %2729 = vdwg.mxu0
    %2730 = vmatpush.bf16.msra.mxu0 %v1680
    %2731 = vmatpush.bf16.msra.mxu0 %v1676
    %2732 = vmatpush.bf16.msra.mxu0 %v1672
    %2733 = vmatpush.bf16.msra.mxu0 %v1668
    %2734 = vmatpush.bf16.msra.mxu0 %v1664
    %2735 = vmatpush.bf16.msra.mxu0 %v1660
    %2736 = vmatpush.bf16.msra.mxu0 %v1656
    %2737 = vmatpush.bf16.msra.mxu0 %v1652
    %2738 = vmatmul.bf16.gmra.mxu0 %v92
    %v2739 = vpop.f32.mrf.mxu0
    %v2740 = vadd.f32 %v492, %v2739
    %v2741 = vpop.f32.mrf.mxu0
    %2742 = vdwg.mxu0
    %2743 = vmatpush.bf16.msra.mxu0 %v1712
    %2744 = vmatpush.bf16.msra.mxu0 %v1708
    %2745 = vmatpush.bf16.msra.mxu0 %v1704
    %2746 = vmatpush.bf16.msra.mxu0 %v1700
    %2747 = vmatpush.bf16.msra.mxu0 %v1696
    %2748 = vmatpush.bf16.msra.mxu0 %v1692
    %2749 = vmatpush.bf16.msra.mxu0 %v1688
    %2750 = vmatpush.bf16.msra.mxu0 %v1684
    %2751 = vmatmul.bf16.gmra.mxu0 %v93
    %v2752 = vpop.f32.mrf.mxu0
    %v2753 = vadd.f32 %v2740, %v2752
    %v2754 = vpop.f32.mrf.mxu0
    %2755 = vdwg.mxu0
    %2756 = vmatpush.bf16.msra.mxu0 %v1744
    %2757 = vmatpush.bf16.msra.mxu0 %v1740
    %2758 = vmatpush.bf16.msra.mxu0 %v1736
    %2759 = vmatpush.bf16.msra.mxu0 %v1732
    %2760 = vmatpush.bf16.msra.mxu0 %v1728
    %2761 = vmatpush.bf16.msra.mxu0 %v1724
    %2762 = vmatpush.bf16.msra.mxu0 %v1720
    %2763 = vmatpush.bf16.msra.mxu0 %v1716
    %2764 = vmatmul.bf16.gmra.mxu0 %v94
    %v2765 = vpop.f32.mrf.mxu0
    %v2766 = vadd.f32 %v2753, %v2765
    %v2767 = vpop.f32.mrf.mxu0
    %2768 = vdwg.mxu0
    %2769 = vmatpush.bf16.msra.mxu0 %v1776
    %2770 = vmatpush.bf16.msra.mxu0 %v1772
    %2771 = vmatpush.bf16.msra.mxu0 %v1768
    %2772 = vmatpush.bf16.msra.mxu0 %v1764
    %2773 = vmatpush.bf16.msra.mxu0 %v1760
    %2774 = vmatpush.bf16.msra.mxu0 %v1756
    %2775 = vmatpush.bf16.msra.mxu0 %v1752
    %2776 = vmatpush.bf16.msra.mxu0 %v1748
    %2777 = vmatmul.bf16.gmra.mxu0 %v95
    %v2778 = vpop.f32.mrf.mxu0
    %v2779 = vadd.f32 %v2766, %v2778
    %v2780 = vpop.f32.mrf.mxu0
    %2781 = vdwg.mxu0
    %2782 = vmatpush.bf16.msra.mxu0 %v1808
    %2783 = vmatpush.bf16.msra.mxu0 %v1804
    %2784 = vmatpush.bf16.msra.mxu0 %v1800
    %2785 = vmatpush.bf16.msra.mxu0 %v1796
    %2786 = vmatpush.bf16.msra.mxu0 %v1792
    %2787 = vmatpush.bf16.msra.mxu0 %v1788
    %2788 = vmatpush.bf16.msra.mxu0 %v1784
    %2789 = vmatpush.bf16.msra.mxu0 %v1780
    %2790 = vmatmul.bf16.gmra.mxu0 %v96
    %v2791 = vpop.f32.mrf.mxu0
    %v2792 = vadd.f32 %v2779, %v2791
    %v2793 = vpop.f32.mrf.mxu0
    %2794 = vdwg.mxu0
    %2795 = vmatpush.bf16.msra.mxu0 %v1840
    %2796 = vmatpush.bf16.msra.mxu0 %v1836
    %2797 = vmatpush.bf16.msra.mxu0 %v1832
    %2798 = vmatpush.bf16.msra.mxu0 %v1828
    %2799 = vmatpush.bf16.msra.mxu0 %v1824
    %2800 = vmatpush.bf16.msra.mxu0 %v1820
    %2801 = vmatpush.bf16.msra.mxu0 %v1816
    %2802 = vmatpush.bf16.msra.mxu0 %v1812
    %2803 = vmatmul.bf16.gmra.mxu0 %v97
    %v2804 = vpop.f32.mrf.mxu0
    %v2805 = vadd.f32 %v2792, %v2804
    %v2806 = vpop.f32.mrf.mxu0
    %2807 = vdwg.mxu0
    %2808 = vmatpush.bf16.msra.mxu0 %v1872
    %2809 = vmatpush.bf16.msra.mxu0 %v1868
    %2810 = vmatpush.bf16.msra.mxu0 %v1864
    %2811 = vmatpush.bf16.msra.mxu0 %v1860
    %2812 = vmatpush.bf16.msra.mxu0 %v1856
    %2813 = vmatpush.bf16.msra.mxu0 %v1852
    %2814 = vmatpush.bf16.msra.mxu0 %v1848
    %2815 = vmatpush.bf16.msra.mxu0 %v1844
    %2816 = vmatmul.bf16.gmra.mxu0 %v98
    %v2817 = vpop.f32.mrf.mxu0
    %v2818 = vadd.f32 %v2805, %v2817
    %v2819 = vpop.f32.mrf.mxu0
    %2820 = vdwg.mxu0
    %2821 = vmatpush.bf16.msra.mxu0 %v1904
    %2822 = vmatpush.bf16.msra.mxu0 %v1900
    %2823 = vmatpush.bf16.msra.mxu0 %v1896
    %2824 = vmatpush.bf16.msra.mxu0 %v1892
    %2825 = vmatpush.bf16.msra.mxu0 %v1888
    %2826 = vmatpush.bf16.msra.mxu0 %v1884
    %2827 = vmatpush.bf16.msra.mxu0 %v1880
    %2828 = vmatpush.bf16.msra.mxu0 %v1876
    %2829 = vmatmul.bf16.gmra.mxu0 %v99
    %v2830 = vpop.f32.mrf.mxu0
    %v2831 = vadd.f32 %v2818, %v2830
    %v2832 = vpop.f32.mrf.mxu0
    %2833 = vdwg.mxu0
    %2834 = vmatpush.bf16.msra.mxu0 %v1936
    %2835 = vmatpush.bf16.msra.mxu0 %v1932
    %2836 = vmatpush.bf16.msra.mxu0 %v1928
    %2837 = vmatpush.bf16.msra.mxu0 %v1924
    %2838 = vmatpush.bf16.msra.mxu0 %v1920
    %2839 = vmatpush.bf16.msra.mxu0 %v1916
    %2840 = vmatpush.bf16.msra.mxu0 %v1912
    %2841 = vmatpush.bf16.msra.mxu0 %v1908
    %2842 = vmatmul.bf16.gmra.mxu0 %v100
    %v2843 = vpop.f32.mrf.mxu0
    %v2844 = vadd.f32 %v2831, %v2843
    %v2845 = vpop.f32.mrf.mxu0
    %2846 = vdwg.mxu0
    %2847 = vmatpush.bf16.msra.mxu0 %v1968
    %2848 = vmatpush.bf16.msra.mxu0 %v1964
    %2849 = vmatpush.bf16.msra.mxu0 %v1960
    %2850 = vmatpush.bf16.msra.mxu0 %v1956
    %2851 = vmatpush.bf16.msra.mxu0 %v1952
    %2852 = vmatpush.bf16.msra.mxu0 %v1948
    %2853 = vmatpush.bf16.msra.mxu0 %v1944
    %2854 = vmatpush.bf16.msra.mxu0 %v1940
    %2855 = vmatmul.bf16.gmra.mxu0 %v101
    %v2856 = vpop.f32.mrf.mxu0
    %v2857 = vadd.f32 %v2844, %v2856
    %v2858 = vpop.f32.mrf.mxu0
    %2859 = vdwg.mxu0
    %2860 = vmatpush.bf16.msra.mxu0 %v2000
    %2861 = vmatpush.bf16.msra.mxu0 %v1996
    %2862 = vmatpush.bf16.msra.mxu0 %v1992
    %2863 = vmatpush.bf16.msra.mxu0 %v1988
    %2864 = vmatpush.bf16.msra.mxu0 %v1984
    %2865 = vmatpush.bf16.msra.mxu0 %v1980
    %2866 = vmatpush.bf16.msra.mxu0 %v1976
    %2867 = vmatpush.bf16.msra.mxu0 %v1972
    %2868 = vmatmul.bf16.gmra.mxu0 %v102
    %v2869 = vpop.f32.mrf.mxu0
    %v2870 = vadd.f32 %v2857, %v2869
    %v2871 = vpop.f32.mrf.mxu0
    %2872 = vdwg.mxu0
    %2873 = vmatpush.bf16.msra.mxu0 %v2032
    %2874 = vmatpush.bf16.msra.mxu0 %v2028
    %2875 = vmatpush.bf16.msra.mxu0 %v2024
    %2876 = vmatpush.bf16.msra.mxu0 %v2020
    %2877 = vmatpush.bf16.msra.mxu0 %v2016
    %2878 = vmatpush.bf16.msra.mxu0 %v2012
    %2879 = vmatpush.bf16.msra.mxu0 %v2008
    %2880 = vmatpush.bf16.msra.mxu0 %v2004
    %2881 = vmatmul.bf16.gmra.mxu0 %v103
    %v2882 = vpop.f32.mrf.mxu0
    %v2883 = vadd.f32 %v2870, %v2882
    %v2884 = vpop.f32.mrf.mxu0
    %2885 = vdwg.mxu0
    %2886 = vmatpush.bf16.msra.mxu0 %v1681
    %2887 = vmatpush.bf16.msra.mxu0 %v1677
    %2888 = vmatpush.bf16.msra.mxu0 %v1673
    %2889 = vmatpush.bf16.msra.mxu0 %v1669
    %2890 = vmatpush.bf16.msra.mxu0 %v1665
    %2891 = vmatpush.bf16.msra.mxu0 %v1661
    %2892 = vmatpush.bf16.msra.mxu0 %v1657
    %2893 = vmatpush.bf16.msra.mxu0 %v1653
    %2894 = vmatmul.bf16.gmra.mxu0 %v92
    %v2895 = vpop.f32.mrf.mxu0
    %v2896 = vadd.f32 %v493, %v2895
    %v2897 = vpop.f32.mrf.mxu0
    %2898 = vdwg.mxu0
    %2899 = vmatpush.bf16.msra.mxu0 %v1713
    %2900 = vmatpush.bf16.msra.mxu0 %v1709
    %2901 = vmatpush.bf16.msra.mxu0 %v1705
    %2902 = vmatpush.bf16.msra.mxu0 %v1701
    %2903 = vmatpush.bf16.msra.mxu0 %v1697
    %2904 = vmatpush.bf16.msra.mxu0 %v1693
    %2905 = vmatpush.bf16.msra.mxu0 %v1689
    %2906 = vmatpush.bf16.msra.mxu0 %v1685
    %2907 = vmatmul.bf16.gmra.mxu0 %v93
    %v2908 = vpop.f32.mrf.mxu0
    %v2909 = vadd.f32 %v2896, %v2908
    %v2910 = vpop.f32.mrf.mxu0
    %2911 = vdwg.mxu0
    %2912 = vmatpush.bf16.msra.mxu0 %v1745
    %2913 = vmatpush.bf16.msra.mxu0 %v1741
    %2914 = vmatpush.bf16.msra.mxu0 %v1737
    %2915 = vmatpush.bf16.msra.mxu0 %v1733
    %2916 = vmatpush.bf16.msra.mxu0 %v1729
    %2917 = vmatpush.bf16.msra.mxu0 %v1725
    %2918 = vmatpush.bf16.msra.mxu0 %v1721
    %2919 = vmatpush.bf16.msra.mxu0 %v1717
    %2920 = vmatmul.bf16.gmra.mxu0 %v94
    %v2921 = vpop.f32.mrf.mxu0
    %v2922 = vadd.f32 %v2909, %v2921
    %v2923 = vpop.f32.mrf.mxu0
    %2924 = vdwg.mxu0
    %2925 = vmatpush.bf16.msra.mxu0 %v1777
    %2926 = vmatpush.bf16.msra.mxu0 %v1773
    %2927 = vmatpush.bf16.msra.mxu0 %v1769
    %2928 = vmatpush.bf16.msra.mxu0 %v1765
    %2929 = vmatpush.bf16.msra.mxu0 %v1761
    %2930 = vmatpush.bf16.msra.mxu0 %v1757
    %2931 = vmatpush.bf16.msra.mxu0 %v1753
    %2932 = vmatpush.bf16.msra.mxu0 %v1749
    %2933 = vmatmul.bf16.gmra.mxu0 %v95
    %v2934 = vpop.f32.mrf.mxu0
    %v2935 = vadd.f32 %v2922, %v2934
    %v2936 = vpop.f32.mrf.mxu0
    %2937 = vdwg.mxu0
    %2938 = vmatpush.bf16.msra.mxu0 %v1809
    %2939 = vmatpush.bf16.msra.mxu0 %v1805
    %2940 = vmatpush.bf16.msra.mxu0 %v1801
    %2941 = vmatpush.bf16.msra.mxu0 %v1797
    %2942 = vmatpush.bf16.msra.mxu0 %v1793
    %2943 = vmatpush.bf16.msra.mxu0 %v1789
    %2944 = vmatpush.bf16.msra.mxu0 %v1785
    %2945 = vmatpush.bf16.msra.mxu0 %v1781
    %2946 = vmatmul.bf16.gmra.mxu0 %v96
    %v2947 = vpop.f32.mrf.mxu0
    %v2948 = vadd.f32 %v2935, %v2947
    %v2949 = vpop.f32.mrf.mxu0
    %2950 = vdwg.mxu0
    %2951 = vmatpush.bf16.msra.mxu0 %v1841
    %2952 = vmatpush.bf16.msra.mxu0 %v1837
    %2953 = vmatpush.bf16.msra.mxu0 %v1833
    %2954 = vmatpush.bf16.msra.mxu0 %v1829
    %2955 = vmatpush.bf16.msra.mxu0 %v1825
    %2956 = vmatpush.bf16.msra.mxu0 %v1821
    %2957 = vmatpush.bf16.msra.mxu0 %v1817
    %2958 = vmatpush.bf16.msra.mxu0 %v1813
    %2959 = vmatmul.bf16.gmra.mxu0 %v97
    %v2960 = vpop.f32.mrf.mxu0
    %v2961 = vadd.f32 %v2948, %v2960
    %v2962 = vpop.f32.mrf.mxu0
    %2963 = vdwg.mxu0
    %2964 = vmatpush.bf16.msra.mxu0 %v1873
    %2965 = vmatpush.bf16.msra.mxu0 %v1869
    %2966 = vmatpush.bf16.msra.mxu0 %v1865
    %2967 = vmatpush.bf16.msra.mxu0 %v1861
    %2968 = vmatpush.bf16.msra.mxu0 %v1857
    %2969 = vmatpush.bf16.msra.mxu0 %v1853
    %2970 = vmatpush.bf16.msra.mxu0 %v1849
    %2971 = vmatpush.bf16.msra.mxu0 %v1845
    %2972 = vmatmul.bf16.gmra.mxu0 %v98
    %v2973 = vpop.f32.mrf.mxu0
    %v2974 = vadd.f32 %v2961, %v2973
    %v2975 = vpop.f32.mrf.mxu0
    %2976 = vdwg.mxu0
    %2977 = vmatpush.bf16.msra.mxu0 %v1905
    %2978 = vmatpush.bf16.msra.mxu0 %v1901
    %2979 = vmatpush.bf16.msra.mxu0 %v1897
    %2980 = vmatpush.bf16.msra.mxu0 %v1893
    %2981 = vmatpush.bf16.msra.mxu0 %v1889
    %2982 = vmatpush.bf16.msra.mxu0 %v1885
    %2983 = vmatpush.bf16.msra.mxu0 %v1881
    %2984 = vmatpush.bf16.msra.mxu0 %v1877
    %2985 = vmatmul.bf16.gmra.mxu0 %v99
    %v2986 = vpop.f32.mrf.mxu0
    %v2987 = vadd.f32 %v2974, %v2986
    %v2988 = vpop.f32.mrf.mxu0
    %2989 = vdwg.mxu0
    %2990 = vmatpush.bf16.msra.mxu0 %v1937
    %2991 = vmatpush.bf16.msra.mxu0 %v1933
    %2992 = vmatpush.bf16.msra.mxu0 %v1929
    %2993 = vmatpush.bf16.msra.mxu0 %v1925
    %2994 = vmatpush.bf16.msra.mxu0 %v1921
    %2995 = vmatpush.bf16.msra.mxu0 %v1917
    %2996 = vmatpush.bf16.msra.mxu0 %v1913
    %2997 = vmatpush.bf16.msra.mxu0 %v1909
    %2998 = vmatmul.bf16.gmra.mxu0 %v100
    %v2999 = vpop.f32.mrf.mxu0
    %v3000 = vadd.f32 %v2987, %v2999
    %v3001 = vpop.f32.mrf.mxu0
    %3002 = vdwg.mxu0
    %3003 = vmatpush.bf16.msra.mxu0 %v1969
    %3004 = vmatpush.bf16.msra.mxu0 %v1965
    %3005 = vmatpush.bf16.msra.mxu0 %v1961
    %3006 = vmatpush.bf16.msra.mxu0 %v1957
    %3007 = vmatpush.bf16.msra.mxu0 %v1953
    %3008 = vmatpush.bf16.msra.mxu0 %v1949
    %3009 = vmatpush.bf16.msra.mxu0 %v1945
    %3010 = vmatpush.bf16.msra.mxu0 %v1941
    %3011 = vmatmul.bf16.gmra.mxu0 %v101
    %v3012 = vpop.f32.mrf.mxu0
    %v3013 = vadd.f32 %v3000, %v3012
    %v3014 = vpop.f32.mrf.mxu0
    %3015 = vdwg.mxu0
    %3016 = vmatpush.bf16.msra.mxu0 %v2001
    %3017 = vmatpush.bf16.msra.mxu0 %v1997
    %3018 = vmatpush.bf16.msra.mxu0 %v1993
    %3019 = vmatpush.bf16.msra.mxu0 %v1989
    %3020 = vmatpush.bf16.msra.mxu0 %v1985
    %3021 = vmatpush.bf16.msra.mxu0 %v1981
    %3022 = vmatpush.bf16.msra.mxu0 %v1977
    %3023 = vmatpush.bf16.msra.mxu0 %v1973
    %3024 = vmatmul.bf16.gmra.mxu0 %v102
    %v3025 = vpop.f32.mrf.mxu0
    %v3026 = vadd.f32 %v3013, %v3025
    %v3027 = vpop.f32.mrf.mxu0
    %3028 = vdwg.mxu0
    %3029 = vmatpush.bf16.msra.mxu0 %v2033
    %3030 = vmatpush.bf16.msra.mxu0 %v2029
    %3031 = vmatpush.bf16.msra.mxu0 %v2025
    %3032 = vmatpush.bf16.msra.mxu0 %v2021
    %3033 = vmatpush.bf16.msra.mxu0 %v2017
    %3034 = vmatpush.bf16.msra.mxu0 %v2013
    %3035 = vmatpush.bf16.msra.mxu0 %v2009
    %3036 = vmatpush.bf16.msra.mxu0 %v2005
    %3037 = vmatmul.bf16.gmra.mxu0 %v103
    %v3038 = vpop.f32.mrf.mxu0
    %v3039 = vadd.f32 %v3026, %v3038
    %v3040 = vpop.f32.mrf.mxu0
    %3041 = vdwg.mxu0
    %v3042 = vmax.f32 %v2571, 0.0
    %v3043 = vmax.f32 %v2727, 0.0
    %v3044 = vmax.f32 %v2883, 0.0
    %v3045 = vmax.f32 %v3039, 0.0
    %v3046 = vld [vmem:[#allocation9] sm:$0xf]
    %v3048 = vperm.slane %v3046, 0
    %v3049 = vperm.slane %v3046, 1
    %v3050 = vperm.slane %v3046, 2
    %v3051 = vperm.slane %v3046, 3
    %v3056 = vmul.f32 %v3042, %v3048
    %v3057 = vmul.f32 %v3043, %v3049
    %v3058 = vmul.f32 %v3044, %v3050
    %v3059 = vmul.f32 %v3045, %v3051
    %v3060 = vadd.f32 %v3056, %v3057
    %v3061 = vadd.f32 %v3060, %v3058
    %v3062 = vadd.f32 %v3061, %v3059
    %3063 = vadd.xlane.f32.xlu0 %v3062
    %v3064 = vpop.xlane.xlu0 %3063
    %3065 = vxpose.xlu0.b32.start [1/16] %v3064, 128
    %3066 = vxpose.xlu0.b32.cont [2/16] 0.0, 128
    %3067 = vxpose.xlu0.b32.cont [3/16] 0.0, 128
    %3068 = vxpose.xlu0.b32.cont [4/16] 0.0, 128
    %3069 = vxpose.xlu0.b32.cont [5/16] 0.0, 128
    %3070 = vxpose.xlu0.b32.cont [6/16] 0.0, 128
    %3071 = vxpose.xlu0.b32.cont [7/16] 0.0, 128
    %3072 = vxpose.xlu0.b32.cont [8/16] 0.0, 128
    %3073 = vxpose.xlu0.b32.cont [9/16] 0.0, 128
    %3074 = vxpose.xlu0.b32.cont [10/16] 0.0, 128
    %3075 = vxpose.xlu0.b32.cont [11/16] 0.0, 128
    %3076 = vxpose.xlu0.b32.cont [12/16] 0.0, 128
    %3077 = vxpose.xlu0.b32.cont [13/16] 0.0, 128
    %3078 = vxpose.xlu0.b32.cont [14/16] 0.0, 128
    %3079 = vxpose.xlu0.b32.cont [15/16] 0.0, 128
    %3080 = vxpose.xlu0.b32.end [16/16] 0.0, 128
    %v3081 = vpop.trf.xlu0
    %v3082 = vpop.trf.xlu0
    %v3083 = vpop.trf.xlu0
    %v3084 = vpop.trf.xlu0
    %v3085 = vpop.trf.xlu0
    %v3086 = vpop.trf.xlu0
    %v3087 = vpop.trf.xlu0
    %v3088 = vpop.trf.xlu0
    %v3089 = vpop.trf.xlu0
    %v3090 = vpop.trf.xlu0
    %v3091 = vpop.trf.xlu0
    %v3092 = vpop.trf.xlu0
    %v3093 = vpop.trf.xlu0
    %v3094 = vpop.trf.xlu0
    %v3095 = vpop.trf.xlu0
    %v3096 = vpop.trf.xlu0
    %v3097 = vld [vmem:[#allocation2] sm:$0x1]
    %3099 = vset.pattern.permute.xlu0 0
    %3100 = vperm.xlu0 %3099, %v3097
    %v3101 = vpop.permute.xlu0 %3100
    %v3103 = vperm.slane %v3101, 0
    %v3104 = vadd.f32 %v3081, %v3103
    %vm3105 = vcmask 57344
    %3106 = vst.msk [vmem:[#allocation11] sm:$0x1] %vm3105, %v3104
    // Predicated region
    $region38: #{tpu_custom_call.1} parent=1 // pred_check
      _
    $region39: #{tpu_custom_call.1} parent=1 // pred_check_branch
      %3108 = sbr.rel (0) target = $region41
    $region40: #{tpu_custom_call.1} parent=1 // pred_region
      %3110 = vsyncadd [#allocation5], 0
      %s3112 = sshll.u32 [#allocation11], 4
      %s3113 = int_to_ptr.vmem [resolvable:$true] %s3112
      %s3114 = sshll.u32 %s5, 4
      %s3115 = int_to_ptr.hbm [resolvable:$true] %s3114
      %3117 = dma.vmem_to_hbm [thread:$0]  %s3113, 16, %s3115, [#allocation5]
    $region41: #{tpu_custom_call.1} parent=1 // pred_fallthru
      _
    // Predicated region
    $region42: #{tpu_custom_call.1} parent=1 // pred_check
      _
    $region43: #{tpu_custom_call.1} parent=1 // pred_check_branch
      %3119 = sbr.rel (0) target = $region45
    $region44: #{tpu_custom_call.1} parent=1 // pred_region
      %3121 = dma.done [#allocation5], 16
    $region45: #{tpu_custom_call.1} parent=1 // pred_fallthru
      _
    %3122 = vsyncpa [#allocation4], 1
    %3123 = vsyncpa [#allocation7], 1
    %3124 = vsyncpa [#allocation10], 1
    %3125 = vsyncpa [#allocation5], 1

</llo_original>
